<compile_context>
chip_gen: v7x
topology: tpu7x:2x2x1
jax: 0.10.0
libtpu: 0.0.40
codegen_flags: <defaults>
</compile_context>

<pallas_src>
import functools

import jax
import jax.numpy as jnp
from jax.experimental import pallas as pl
from jax.experimental.pallas import tpu as pltpu

_LANE_WIDTH = 512              # lane-dense slab width (multiple of 128)
_TILE_BYTES_PER_INPUT = 1 << 20  # ~1 MiB per-input tile -> ~85% HBM roofline
_XLA_FASTPATH_ELEMS = 1 << 16    # below this, plain XLA beats kernel launch


def _weighted_mse_kernel(params_ref, pred_ref, target_ref, out_ref, acc_ref,
                         *, rows, tile_r, num_tiles, ragged):
    """Streamed weighted-SE partial sum over (tile_r, 512) tiles."""
    i = pl.program_id(0)

    @pl.when(i == 0)
    def _():
        acc_ref[...] = jnp.zeros_like(acc_ref)

    mid = params_ref[0]    # (min_age + max_age) / 2
    wcoef = params_ref[1]  # 2 * alpha / (max_age - min_age)

    p = pred_ref[...].astype(jnp.float32)
    t = target_ref[...].astype(jnp.float32)

    # Folded weight: 1 + (2*alpha/range) * |t - mid|
    weights = 1.0 + wcoef * jnp.abs(t - mid)
    diff = p - t
    wse = weights * (diff * diff)

    def fold(x):
        # (tile_r, W) -> (8, W): layout-preserving reshape + pure VPU adds
        # over sublane groups; keeps the accumulator tiny.
        return x.reshape(tile_r // 8, 8, x.shape[-1]).sum(axis=0)

    if ragged:
        last = num_tiles - 1

        # Only the final tile can contain rows past the real slab; mask it
        # there and keep an unmasked fast path for interior tiles.
        @pl.when(i == last)
        def _():
            row0 = last * tile_r
            row_ids = row0 + jax.lax.broadcasted_iota(jnp.int32, wse.shape, 0)
            acc_ref[...] += fold(jnp.where(row_ids < rows, wse, 0.0))

        @pl.when(i != last)
        def _():
            acc_ref[...] += fold(wse)
    else:
        acc_ref[...] += fold(wse)

    @pl.when(i == num_tiles - 1)
    def _():
        out_ref[0, 0] = jnp.sum(acc_ref[...])


def _weighted_se_sum_xla(p, t, mid, wcoef):
    """Plain-XLA sum of weighted squared errors (fast path / lane tail)."""
    p = p.astype(jnp.float32)
    t = t.astype(jnp.float32)
    w = 1.0 + wcoef * jnp.abs(t - mid)
    d = p - t
    return jnp.sum(w * d * d)


def weighted_mse_loss(pred, target, *, min_age=0.0, max_age=100.0, alpha=1.0):
    """Matches WeightedMSELoss.forward: mean(weights * (pred - target)**2)."""
    assert pred.shape == target.shape
    age_range = float(max_age) - float(min_age)
    if age_range == 0.0:
        raise ValueError("max_age must differ from min_age")

    mid = (float(min_age) + float(max_age)) * 0.5
    wcoef = 2.0 * float(alpha) / age_range

    n = pred.size
    p = pred.reshape(-1)
    t = target.reshape(-1)

    # Small inputs: kernel launch + pipeline ramp dwarfs the math.
    if n < _XLA_FASTPATH_ELEMS:
        return _weighted_se_sum_xla(p, t, mid, wcoef) / n

    w = _LANE_WIDTH
    rows = n // w                 # full 512-wide rows streamed by the kernel
    n_main = rows * w
    tail = n - n_main             # <512 trailing elements, handled in XLA

    # Dtype-scaled tile: ~1 MiB of input bytes per grid step, rows mult of 8.
    itemsize = jnp.dtype(pred.dtype).itemsize
    target_rows = max(8, _TILE_BYTES_PER_INPUT // (w * itemsize))
    tile_r = min(target_rows, (rows // 8) * 8)
    num_tiles = int(pl.cdiv(rows, tile_r))
    ragged = (rows % tile_r) != 0

    # Scalar parameters in SMEM (scalar prefetch) -> no closure capture,
    # no recompile per (min_age, max_age, alpha).
    params = jnp.array([mid, wcoef], dtype=jnp.float32)

    # Aligned prefix view; keeps original dtype in HBM (upcast in-kernel).
    p_main = p[:n_main].reshape(rows, w)
    t_main = t[:n_main].reshape(rows, w)

    kernel = functools.partial(
        _weighted_mse_kernel,
        rows=rows, tile_r=tile_r, num_tiles=num_tiles, ragged=ragged)

    # NOTE: on v7x a leading pltpu.CORE_PARALLEL axis (one partial per TC)
    # could engage both TensorCores; single-axis "arbitrary" reduction is the
    # correct/fast choice on single-TC v5e/v6e.
    partial_sum = pl.pallas_call(
        kernel,
        out_shape=jax.ShapeDtypeStruct((1, 1), jnp.float32),
        grid_spec=pltpu.PrefetchScalarGridSpec(
            num_scalar_prefetch=1,
            grid=(num_tiles,),
            in_specs=[
                pl.BlockSpec((tile_r, w), lambda i, params_ref: (i, 0)),
                pl.BlockSpec((tile_r, w), lambda i, params_ref: (i, 0)),
            ],
            out_specs=pl.BlockSpec((1, 1), lambda i, params_ref: (0, 0),
                                   memory_space=pltpu.SMEM),
            scratch_shapes=[pltpu.VMEM((8, w), jnp.float32)],
        ),
        compiler_params=pltpu.CompilerParams(
            dimension_semantics=("arbitrary",)),
    )(params, p_main, t_main)[0, 0]

    total = partial_sum
    if tail:
        total = total + _weighted_se_sum_xla(p[n_main:], t[n_main:], mid, wcoef)

    # Mean over the ORIGINAL element count.
    return total / n


def _reference(pred, target, *, min_age=0.0, max_age=100.0, alpha=1.0):
    rng = max_age - min_age
    p = pred.astype(jnp.float32)
    t = target.astype(jnp.float32)
    nt = (t - min_age) / rng
    wgt = 1.0 + alpha * (2.0 * jnp.abs(nt - 0.5))
    return jnp.mean(wgt * (p - t) ** 2)


if __name__ == "__main__":
    key = jax.random.PRNGKey(0)

    def make_case(k, shape, dtype):
        k1, k2 = jax.random.split(k)
        target = jax.random.uniform(k1, shape, jnp.float32, 0.0, 100.0)
        pred = target + jax.random.normal(k2, shape, jnp.float32) * 5.0
        return pred.astype(dtype), target.astype(dtype)

    cases = [
        ((256,), jnp.float32),          # tiny age batch -> XLA fast path
        ((1000,), jnp.float32),         # ragged tiny batch -> XLA fast path
        ((1024, 512), jnp.float32),     # kernel, exact tiles (no mask at all)
        ((3, 512, 300), jnp.float32),   # kernel, ragged final tile
        ((300000,), jnp.float32),       # kernel, ragged rows + lane tail in XLA
        ((2048, 600), jnp.bfloat16),    # kernel, bf16 (1024-row tiles), ragged
    ]

    keys = jax.random.split(key, len(cases))
    for k, (shape, dtype) in zip(keys, cases):
        pred, target = make_case(k, shape, dtype)
        loss = jax.block_until_ready(
            weighted_mse_loss(pred, target, min_age=0.0, max_age=100.0, alpha=1.0))
        ref = _reference(pred, target, min_age=0.0, max_age=100.0, alpha=1.0)
        assert jnp.allclose(loss, ref, rtol=2e-5, atol=1e-5), (shape, dtype, loss, ref)

    print("KERNEL_OK")
</pallas_src>

<mosaic_0001>
module attributes {stable_mosaic.version = 11 : i64} {
  func.func @_weighted_mse_kernel(%arg0: i32, %arg1: memref<2xf32, #tpu.memory_space<smem>>, %arg2: memref<512x512xf32, #tpu.memory_space<vmem>>, %arg3: memref<512x512xf32, #tpu.memory_space<vmem>>, %arg4: memref<1x1xf32, #tpu.memory_space<smem>>, %arg5: memref<8x512xf32, #tpu.memory_space<vmem>>) attributes {dimension_semantics = [#tpu.dimension_semantics<arbitrary>], iteration_bounds = array<i64: 2>, scalar_prefetch = 1 : i64, scratch_operands = 1 : i64, tpu.core_type = #tpu.core_type<tc>, window_params = [{transform_indices = @transform_0, window_bounds = array<i64: 512, 512>}, {transform_indices = @transform_1, window_bounds = array<i64: 512, 512>}, {transform_indices = @transform_2, window_bounds = array<i64: 1, 1>}]} {
    %c0_i32 = arith.constant 0 : i32
    %0 = arith.cmpi eq, %arg0, %c0_i32 : i32
    %1 = arith.extui %0 : i1 to i32
    %c0_i32_0 = arith.constant 0 : i32
    %2 = arith.cmpi ne, %1, %c0_i32_0 : i32
    scf.if %2 {
      %cst_11 = arith.constant 0.000000e+00 : f32
      %25 = vector.broadcast %cst_11 : f32 to vector<8x512xf32>
      %c0_12 = arith.constant 0 : index
      %c0_13 = arith.constant 0 : index
      %26 = vector.load %arg5[%c0_12, %c0_13] : memref<8x512xf32, #tpu.memory_space<vmem>>, vector<8x512xf32>
      tpu.vector_store %arg5[%c0_12, %c0_13], %25 {strides = array<i32>} : memref<8x512xf32, #tpu.memory_space<vmem>>, vector<8x512xf32>,
    } else {
    }
    %c0 = arith.constant 0 : index
    %3 = memref.load %arg1[%c0] : memref<2xf32, #tpu.memory_space<smem>>
    %c1 = arith.constant 1 : index
    %4 = memref.load %arg1[%c1] : memref<2xf32, #tpu.memory_space<smem>>
    %c0_1 = arith.constant 0 : index
    %c0_2 = arith.constant 0 : index
    %5 = vector.load %arg2[%c0_1, %c0_2] : memref<512x512xf32, #tpu.memory_space<vmem>>, vector<512x512xf32>
    %c0_3 = arith.constant 0 : index
    %c0_4 = arith.constant 0 : index
    %6 = vector.load %arg3[%c0_3, %c0_4] : memref<512x512xf32, #tpu.memory_space<vmem>>, vector<512x512xf32>
    %7 = vector.broadcast %3 : f32 to vector<512x512xf32>
    %8 = arith.subf %6, %7 : vector<512x512xf32>
    %9 = math.absf %8 : vector<512x512xf32>
    %10 = vector.broadcast %4 : f32 to vector<512x512xf32>
    %11 = arith.mulf %10, %9 : vector<512x512xf32>
    %cst = arith.constant 1.000000e+00 : f32
    %12 = vector.broadcast %cst : f32 to vector<512x512xf32>
    %13 = arith.addf %12, %11 : vector<512x512xf32>
    %14 = arith.subf %5, %6 : vector<512x512xf32>
    %15 = arith.mulf %14, %14 : vector<512x512xf32>
    %16 = arith.mulf %13, %15 : vector<512x512xf32>
    %c0_5 = arith.constant 0 : index
    %c0_6 = arith.constant 0 : index
    %17 = vector.load %arg5[%c0_5, %c0_6] : memref<8x512xf32, #tpu.memory_space<vmem>>, vector<8x512xf32>
    %18 = vector.shape_cast %16 : vector<512x512xf32> to vector<64x8x512xf32>
    %cst_7 = arith.constant dense<0.000000e+00> : vector<8x512xf32>
    %19 = vector.multi_reduction <add>, %18, %cst_7 [0] : vector<64x8x512xf32> to vector<8x512xf32>
    %20 = arith.addf %17, %19 : vector<8x512xf32>
    %c0_8 = arith.constant 0 : index
    %c0_9 = arith.constant 0 : index
    %21 = vector.load %arg5[%c0_8, %c0_9] : memref<8x512xf32, #tpu.memory_space<vmem>>, vector<8x512xf32>
    tpu.vector_store %arg5[%c0_8, %c0_9], %20 {strides = array<i32>} : memref<8x512xf32, #tpu.memory_space<vmem>>, vector<8x512xf32>,
    %c1_i32 = arith.constant 1 : i32
    %22 = arith.cmpi eq, %arg0, %c1_i32 : i32
    %23 = arith.extui %22 : i1 to i32
    %c0_i32_10 = arith.constant 0 : i32
    %24 = arith.cmpi ne, %23, %c0_i32_10 : i32
    scf.if %24 {
      %c0_11 = arith.constant 0 : index
      %c0_12 = arith.constant 0 : index
      %25 = vector.load %arg5[%c0_11, %c0_12] : memref<8x512xf32, #tpu.memory_space<vmem>>, vector<8x512xf32>
      %26 = vector.shape_cast %25 : vector<8x512xf32> to vector<1x8x512xf32>
      %cst_13 = arith.constant dense<0.000000e+00> : vector<1xf32>
      %27 = vector.multi_reduction <add>, %26, %cst_13 [1, 2] : vector<1x8x512xf32> to vector<1xf32>
      %28 = vector.shape_cast %27 : vector<1xf32> to vector<1x1x1xf32>
      %29 = vector.extract %28[0, 0, 0] : f32 from vector<1x1x1xf32>
      %c0_14 = arith.constant 0 : index
      %c0_15 = arith.constant 0 : index
      %30 = memref.load %arg4[%c0_14, %c0_15] : memref<1x1xf32, #tpu.memory_space<smem>>
      memref.store %29, %arg4[%c0_14, %c0_15] : memref<1x1xf32, #tpu.memory_space<smem>>
    } else {
    }
    return
  }
  func.func @transform_0(%arg0: i32, %arg1: memref<2xf32, #tpu.memory_space<smem>>) -> (i32, i32) {
    %c0_i32 = arith.constant 0 : i32
    %c0_i32_0 = arith.constant 0 : i32
    return %arg0, %c0_i32 : i32, i32
  }
  func.func @transform_1(%arg0: i32, %arg1: memref<2xf32, #tpu.memory_space<smem>>) -> (i32, i32) {
    %c0_i32 = arith.constant 0 : i32
    %c0_i32_0 = arith.constant 0 : i32
    return %arg0, %c0_i32 : i32, i32
  }
  func.func @transform_2(%arg0: i32, %arg1: memref<2xf32, #tpu.memory_space<smem>>) -> (i32, i32) {
    %c0_i32 = arith.constant 0 : i32
    %c0_i32_0 = arith.constant 0 : i32
    %c0_i32_1 = arith.constant 0 : i32
    return %c0_i32, %c0_i32_0 : i32, i32
  }
}

</mosaic_0001>

<llo_original>
// kernel: tpu_custom_call.1
$region0: #{tpu_custom_call.1}
  #allocation0 [shape = 'u32[]', space=smem, size = 0x4, offset = 0x4, fixed_abs, tag = 'smem constant byte address 0x4 - core index']
  #allocation1 [shape = 'u32[144,128]{1,0:T(1,128)}', space=vmem, size = 0x12000, scoped, tag = 'internal scratch']
  #allocation2 [shape = 'f32[8,512]{1,0:T(8,128)}', space=vmem, size = 0x4000, scoped, tag = 'scratch operand']
  #allocation3 [shape = 's32[1]{0}', space=sflag, size = 0x4, scoped, tag = 'scoped memory for tpu_custom_call.1']
  #allocation4 [shape = 'u8[512]{0}', space=smem, size = 0x200, scoped, tag = 'prefetched SMEM operand 0']
  %s0 = inlined_call_operand.hbm [shape: f32[2], index: 0, kind: input, shape index: {}]
  %s1 = inlined_call_operand.hbm [shape: f32[1024,512], index: 1, kind: input, shape index: {}]
  %s2 = inlined_call_operand.hbm [shape: f32[1024,512], index: 2, kind: input, shape index: {}]
  %s3 = inlined_call_operand.hbm [shape: f32[1,1], index: 3, kind: output, shape index: {}]
  %s4 = sld [smem:[#allocation0]]
  $region57: #{tpu_custom_call.1} parent=0
    _
  %s6 = ssub.s32 1, %s4
  %s7 = scalar_select 0, %s6, %s4
  %9 = dma.hbm_to_smem %s0, 16, [#allocation4], [#allocation3]
  %10 = dma.done [#allocation3], 16
  %11 = sfence
  $region1: #{tpu_custom_call.1} parent=0
    #allocation5 [shape = 'u8[2097152]{0}', space=vmem, size = 0x200000, scoped, tag = 'input window, operand 1']
    #allocation6 [shape = 's32[2]{0}', space=sflag, size = 0x8, scoped, tag = 'scoped memory for tpu_custom_call.1']
    #allocation7 [shape = 's32[2]{0}', space=sflag, size = 0x8, scoped, tag = 'scoped memory for tpu_custom_call.1']
    #allocation8 [shape = 'u8[2097152]{0}', space=vmem, size = 0x200000, scoped, tag = 'input window, operand 2']
    #allocation9 [shape = 's32[2]{0}', space=sflag, size = 0x8, scoped, tag = 'scoped memory for tpu_custom_call.1']
    #allocation10 [shape = 'u8[512]{0}', space=smem, size = 0x200, scoped, tag = 'output window, operand 0, single buffered']
    %12 = vsyncpa [#allocation6], 0
    %s13 = scalar_lea.sflag [#allocation6], 1
    %14 = vsyncpa %s13, 0
    %15 = vsyncpa [#allocation9], 0
    %s16 = scalar_lea.sflag [#allocation9], 1
    %17 = vsyncpa %s16, 0
    %18 = vsyncpa [#allocation7], 0
    loop: start=0, step=1, limit=4
    $region2: #{tpu_custom_call.1} parent=1 // loop_pre_header
      _
    $region3: #{tpu_custom_call.1} parent=1 // loop_header
      %s20 = sphi 0, %s24
      %p21 = scmp.ge.s32.totalorder %s20, 4
      %s30 = sphi 0, %s32
      %s33 = sphi 0, %s30
      %s34 = sphi 0, %s33
      %s50 = sphi 0, %s34
      %s56 = sphi 0, %s58
      %s59 = sphi 0, %s56
      %s60 = sphi 0, %s59
      %s76 = sphi 0, %s60
      %s80 = sphi 0, %s80
      %s82 = sphi 0, %s80
      %s83 = sphi 0, %s82
      %s97 = sphi 0, %s83
    $region4: #{tpu_custom_call.1} parent=1 // loop_header_branch
      %23 = sbr.rel (%p21) target = $region8
    $region5: #{tpu_custom_call.1} parent=1 // loop_body
      %s25 = ssub.s32 %s20, 1
      %s26 = ssub.s32 %s20, 2
      %s27 = sadd.s32 %s20, 1
      %s28 = ssub.s32 %s20, %s27
      %p29 = scmp.eq.s32.totalorder %s28, 0
      %s31 = sadd.s32 %s30, 1
      %s32 = scalar_select %p29, %s30, %s31
      %p35 = pneg %p29
      %p36 = scmp.eq.s32.totalorder %s20, 1
      %p37 = por %p35, %p36
      %p38 = scmp.ne.s32.totalorder %s30, %s33
      %p39 = scmp.eq.s32.totalorder %s20, 0
      %p40 = por %p38, %p39
      %p41 = scmp.ne.s32.totalorder %s30, %s33
      %p42 = scmp.eq.s32.totalorder %s25, 1
      %p43 = por %p41, %p42
      %p44 = scmp.ne.s32.totalorder %s33, %s34
      %p45 = scmp.eq.s32.totalorder %s25, 0
      %p46 = por %p44, %p45
      %p47 = scmp.ne.s32.totalorder %s33, %s34
      %p48 = scmp.eq.s32.totalorder %s26, 1
      %p49 = por %p47, %p48
      %p51 = scmp.ne.s32.totalorder %s34, %s50
      %p52 = scmp.eq.s32.totalorder %s26, 0
      %p53 = por %p51, %p52
      %s54 = ssub.s32 %s20, %s27
      %p55 = scmp.eq.s32.totalorder %s54, 0
      %s57 = sadd.s32 %s56, 1
      %s58 = scalar_select %p55, %s56, %s57
      %p61 = pneg %p55
      %p62 = scmp.eq.s32.totalorder %s20, 1
      %p63 = por %p61, %p62
      %p64 = scmp.ne.s32.totalorder %s56, %s59
      %p65 = scmp.eq.s32.totalorder %s20, 0
      %p66 = por %p64, %p65
      %p67 = scmp.ne.s32.totalorder %s56, %s59
      %p68 = scmp.eq.s32.totalorder %s25, 1
      %p69 = por %p67, %p68
      %p70 = scmp.ne.s32.totalorder %s59, %s60
      %p71 = scmp.eq.s32.totalorder %s25, 0
      %p72 = por %p70, %p71
      %p73 = scmp.ne.s32.totalorder %s59, %s60
      %p74 = scmp.eq.s32.totalorder %s26, 1
      %p75 = por %p73, %p74
      %p77 = scmp.ne.s32.totalorder %s60, %s76
      %p78 = scmp.eq.s32.totalorder %s26, 0
      %p79 = por %p77, %p78
      %s81 = sadd.s32 %s80, 1
      %p84 = scmp.eq.s32.totalorder %s20, 1
      %p85 = scmp.ne.s32.totalorder %s80, %s82
      %p86 = scmp.eq.s32.totalorder %s20, 0
      %p87 = por %p85, %p86
      %p88 = scmp.ne.s32.totalorder %s80, %s82
      %p89 = scmp.eq.s32.totalorder %s25, 1
      %p90 = por %p88, %p89
      %p91 = scmp.ne.s32.totalorder %s82, %s83
      %p92 = scmp.eq.s32.totalorder %s25, 0
      %p93 = por %p91, %p92
      %p94 = scmp.ne.s32.totalorder %s82, %s83
      %p95 = scmp.eq.s32.totalorder %s26, 1
      %p96 = por %p94, %p95
      %p98 = scmp.ne.s32.totalorder %s83, %s97
      %p99 = scmp.eq.s32.totalorder %s26, 0
      %p100 = por %p98, %p99
      %p101 = scmp.le.s32.totalorder 1, %s20
      %p102 = scmp.lt.s32.totalorder %s20, 3
      %p103 = pnand %p101, %p102
      %p104 = pneg %p103
      // Predicated region
      $region9: #{tpu_custom_call.1} parent=5 // pred_check
        _
      $region10: #{tpu_custom_call.1} parent=5 // pred_check_branch
        %106 = sbr.rel (%p103) target = $region12
      $region11: #{tpu_custom_call.1} parent=5 // pred_region
        %s107 = ssub.s32 %s20, 1
      $region12: #{tpu_custom_call.1} parent=5 // pred_fallthru
        _
      %p108 = scmp.lt.s32.totalorder %s20, 2
      // Predicated region
      $region13: #{tpu_custom_call.1} parent=5 // pred_check
        %p109 = pneg %p108
      $region14: #{tpu_custom_call.1} parent=5 // pred_check_branch
        %111 = sbr.rel (%p109) target = $region16
      $region15: #{tpu_custom_call.1} parent=5 // pred_region
        // Predicated region
        $region17: #{tpu_custom_call.1} parent=15 // pred_check
          %p112 = pneg %p40
        $region18: #{tpu_custom_call.1} parent=15 // pred_check_branch
          %114 = sbr.rel (%p112) target = $region20
        $region19: #{tpu_custom_call.1} parent=15 // pred_region
          %s115 = sand.u32 %s30, 1
          %s116 = scalar_lea.sflag [#allocation6], %s115
          %s117 = sand.u32 %s30, 1
          %s118 = smul.addr %s117, 2048
          %s119 = scalar_lea.vmem [#allocation5], %s118
          %s120 = smul.u32 64, %s20
          %s122 = ssub.s32 32768, 32768
          %123 = vsyncadd %s116, %s122
          %s124 = smul.addr %s120, 4
          %s125 = smul.addr %s124, 128
          %s126 = scalar_lea.hbm %s1, %s125
          %s127 = sshll.u32 %s119, 4
          %s128 = int_to_ptr.vmem [resolvable:$true] %s127
          %133 = dma.hbm_to_vmem [thread:$0]  %s126, 32768, %s128, %s116, 512, 512, 32
        $region20: #{tpu_custom_call.1} parent=15 // pred_fallthru
          _
        // Predicated region
        $region21: #{tpu_custom_call.1} parent=15 // pred_check
          %p134 = pneg %p66
        $region22: #{tpu_custom_call.1} parent=15 // pred_check_branch
          %136 = sbr.rel (%p134) target = $region24
        $region23: #{tpu_custom_call.1} parent=15 // pred_region
          %s137 = sand.u32 %s56, 1
          %s138 = scalar_lea.sflag [#allocation9], %s137
          %s139 = sand.u32 %s56, 1
          %s140 = smul.addr %s139, 2048
          %s141 = scalar_lea.vmem [#allocation8], %s140
          %s142 = smul.u32 64, %s20
          %s144 = ssub.s32 32768, 32768
          %145 = vsyncadd %s138, %s144
          %s146 = smul.addr %s142, 4
          %s147 = smul.addr %s146, 128
          %s148 = scalar_lea.hbm %s2, %s147
          %s149 = sshll.u32 %s141, 4
          %s150 = int_to_ptr.vmem [resolvable:$true] %s149
          %155 = dma.hbm_to_vmem [thread:$0]  %s148, 32768, %s150, %s138, 512, 512, 32
        $region24: #{tpu_custom_call.1} parent=15 // pred_fallthru
          _
      $region16: #{tpu_custom_call.1} parent=5 // pred_fallthru
        _
      %p156 = scmp.le.s32.totalorder 1, %s20
      %p157 = scmp.lt.s32.totalorder %s20, 3
      %p158 = pnand %p156, %p157
      %p159 = pneg %p158
      // Predicated region
      $region25: #{tpu_custom_call.1} parent=5 // pred_check
        _
      $region26: #{tpu_custom_call.1} parent=5 // pred_check_branch
        %161 = sbr.rel (%p158) target = $region28
      $region27: #{tpu_custom_call.1} parent=5 // pred_region
        %s162 = ssub.s32 %s20, 1
        %s163 = sand.u32 %s33, 1
        %s164 = scalar_lea.sflag [#allocation6], %s163
        %s165 = sand.u32 %s33, 1
        %s166 = smul.addr %s165, 2048
        %s167 = scalar_lea.vmem [#allocation5], %s166
        // Predicated region
        $region29: #{tpu_custom_call.1} parent=27 // pred_check
          %p168 = pneg %p46
        $region30: #{tpu_custom_call.1} parent=27 // pred_check_branch
          %170 = sbr.rel (%p168) target = $region32
        $region31: #{tpu_custom_call.1} parent=27 // pred_region
          %171 = dma.done %s164, 32768
        $region32: #{tpu_custom_call.1} parent=27 // pred_fallthru
          _
        %s172 = sand.u32 %s59, 1
        %s173 = scalar_lea.sflag [#allocation9], %s172
        %s174 = sand.u32 %s59, 1
        %s175 = smul.addr %s174, 2048
        %s176 = scalar_lea.vmem [#allocation8], %s175
        // Predicated region
        $region33: #{tpu_custom_call.1} parent=27 // pred_check
          %p177 = pneg %p72
        $region34: #{tpu_custom_call.1} parent=27 // pred_check_branch
          %179 = sbr.rel (%p177) target = $region36
        $region35: #{tpu_custom_call.1} parent=27 // pred_region
          %180 = dma.done %s173, 32768
        $region36: #{tpu_custom_call.1} parent=27 // pred_fallthru
          _
        %s181 = sand.u32 %s33, 1
        %s182 = scalar_lea.sflag [#allocation6], %s181
        %s183 = sand.u32 %s33, 1
        %s184 = smul.addr %s183, 2048
        %s185 = scalar_lea.vmem [#allocation5], %s184
        %p186 = pneg %p46
        %p187 = pneg %p43
        %s188 = sand.u32 %s59, 1
        %s189 = scalar_lea.sflag [#allocation9], %s188
        %s190 = sand.u32 %s59, 1
        %s191 = smul.addr %s190, 2048
        %s192 = scalar_lea.vmem [#allocation8], %s191
        %p193 = pneg %p72
        %p194 = pneg %p69
        %p195 = pneg %p93
        %p196 = pneg %p90
        %s197 = smul.u32 64, %s25
        %s198 = smul.u32 64, %s25
        %p199 = scmp.eq.s32.totalorder %s25, 0
        // Predicated region
        $region37: #{tpu_custom_call.1} parent=27 // pred_check
          %p200 = pneg %p199
        $region38: #{tpu_custom_call.1} parent=27 // pred_check_branch
          %202 = sbr.rel (%p200) target = $region40
        $region39: #{tpu_custom_call.1} parent=27 // pred_region
          %203 = vst [vmem:[#allocation2] sm:$0xff] 0.0
          %204 = vst [vmem:[#allocation2 + $0x8] sm:$0xff] 0.0
          %205 = vst [vmem:[#allocation2 + $0x10] sm:$0xff] 0.0
          %206 = vst [vmem:[#allocation2 + $0x18] sm:$0xff] 0.0
        $region40: #{tpu_custom_call.1} parent=27 // pred_fallthru
          _
        %s207 = sld [smem:[#allocation4]]
        %s208 = sld [smem:[#allocation4 + $0x1]]
        %v209 = vld [vmem:[%s167] sm:$0xff]
        %v210 = vld [vmem:[%s167 + $0x8] sm:$0xff]
        %v211 = vld [vmem:[%s167 + $0x10] sm:$0xff]
        %v212 = vld [vmem:[%s167 + $0x18] sm:$0xff]
        %v213 = vld [vmem:[%s167 + $0x20] sm:$0xff]
        %v214 = vld [vmem:[%s167 + $0x28] sm:$0xff]
        %v215 = vld [vmem:[%s167 + $0x30] sm:$0xff]
        %v216 = vld [vmem:[%s167 + $0x38] sm:$0xff]
        %v217 = vld [vmem:[%s167 + $0x40] sm:$0xff]
        %v218 = vld [vmem:[%s167 + $0x48] sm:$0xff]
        %v219 = vld [vmem:[%s167 + $0x50] sm:$0xff]
        %v220 = vld [vmem:[%s167 + $0x58] sm:$0xff]
        %v221 = vld [vmem:[%s167 + $0x60] sm:$0xff]
        %v222 = vld [vmem:[%s167 + $0x68] sm:$0xff]
        %v223 = vld [vmem:[%s167 + $0x70] sm:$0xff]
        %v224 = vld [vmem:[%s167 + $0x78] sm:$0xff]
        %v225 = vld [vmem:[%s167 + $0x80] sm:$0xff]
        %v226 = vld [vmem:[%s167 + $0x88] sm:$0xff]
        %v227 = vld [vmem:[%s167 + $0x90] sm:$0xff]
        %v228 = vld [vmem:[%s167 + $0x98] sm:$0xff]
        %v229 = vld [vmem:[%s167 + $0xa0] sm:$0xff]
        %v230 = vld [vmem:[%s167 + $0xa8] sm:$0xff]
        %v231 = vld [vmem:[%s167 + $0xb0] sm:$0xff]
        %v232 = vld [vmem:[%s167 + $0xb8] sm:$0xff]
        %v233 = vld [vmem:[%s167 + $0xc0] sm:$0xff]
        %v234 = vld [vmem:[%s167 + $0xc8] sm:$0xff]
        %v235 = vld [vmem:[%s167 + $0xd0] sm:$0xff]
        %v236 = vld [vmem:[%s167 + $0xd8] sm:$0xff]
        %v237 = vld [vmem:[%s167 + $0xe0] sm:$0xff]
        %v238 = vld [vmem:[%s167 + $0xe8] sm:$0xff]
        %v239 = vld [vmem:[%s167 + $0xf0] sm:$0xff]
        %v240 = vld [vmem:[%s167 + $0xf8] sm:$0xff]
        %v241 = vld [vmem:[%s167 + $0x100] sm:$0xff]
        %v242 = vld [vmem:[%s167 + $0x108] sm:$0xff]
        %v243 = vld [vmem:[%s167 + $0x110] sm:$0xff]
        %v244 = vld [vmem:[%s167 + $0x118] sm:$0xff]
        %v245 = vld [vmem:[%s167 + $0x120] sm:$0xff]
        %v246 = vld [vmem:[%s167 + $0x128] sm:$0xff]
        %v247 = vld [vmem:[%s167 + $0x130] sm:$0xff]
        %v248 = vld [vmem:[%s167 + $0x138] sm:$0xff]
        %v249 = vld [vmem:[%s167 + $0x140] sm:$0xff]
        %v250 = vld [vmem:[%s167 + $0x148] sm:$0xff]
        %v251 = vld [vmem:[%s167 + $0x150] sm:$0xff]
        %v252 = vld [vmem:[%s167 + $0x158] sm:$0xff]
        %v253 = vld [vmem:[%s167 + $0x160] sm:$0xff]
        %v254 = vld [vmem:[%s167 + $0x168] sm:$0xff]
        %v255 = vld [vmem:[%s167 + $0x170] sm:$0xff]
        %v256 = vld [vmem:[%s167 + $0x178] sm:$0xff]
        %v257 = vld [vmem:[%s167 + $0x180] sm:$0xff]
        %v258 = vld [vmem:[%s167 + $0x188] sm:$0xff]
        %v259 = vld [vmem:[%s167 + $0x190] sm:$0xff]
        %v260 = vld [vmem:[%s167 + $0x198] sm:$0xff]
        %v261 = vld [vmem:[%s167 + $0x1a0] sm:$0xff]
        %v262 = vld [vmem:[%s167 + $0x1a8] sm:$0xff]
        %v263 = vld [vmem:[%s167 + $0x1b0] sm:$0xff]
        %v264 = vld [vmem:[%s167 + $0x1b8] sm:$0xff]
        %v265 = vld [vmem:[%s167 + $0x1c0] sm:$0xff]
        %v266 = vld [vmem:[%s167 + $0x1c8] sm:$0xff]
        %v267 = vld [vmem:[%s167 + $0x1d0] sm:$0xff]
        %v268 = vld [vmem:[%s167 + $0x1d8] sm:$0xff]
        %v269 = vld [vmem:[%s167 + $0x1e0] sm:$0xff]
        %v270 = vld [vmem:[%s167 + $0x1e8] sm:$0xff]
        %v271 = vld [vmem:[%s167 + $0x1f0] sm:$0xff]
        %v272 = vld [vmem:[%s167 + $0x1f8] sm:$0xff]
        %v273 = vld [vmem:[%s167 + $0x200] sm:$0xff]
        %v274 = vld [vmem:[%s167 + $0x208] sm:$0xff]
        %v275 = vld [vmem:[%s167 + $0x210] sm:$0xff]
        %v276 = vld [vmem:[%s167 + $0x218] sm:$0xff]
        %v277 = vld [vmem:[%s167 + $0x220] sm:$0xff]
        %v278 = vld [vmem:[%s167 + $0x228] sm:$0xff]
        %v279 = vld [vmem:[%s167 + $0x230] sm:$0xff]
        %v280 = vld [vmem:[%s167 + $0x238] sm:$0xff]
        %v281 = vld [vmem:[%s167 + $0x240] sm:$0xff]
        %v282 = vld [vmem:[%s167 + $0x248] sm:$0xff]
        %v283 = vld [vmem:[%s167 + $0x250] sm:$0xff]
        %v284 = vld [vmem:[%s167 + $0x258] sm:$0xff]
        %v285 = vld [vmem:[%s167 + $0x260] sm:$0xff]
        %v286 = vld [vmem:[%s167 + $0x268] sm:$0xff]
        %v287 = vld [vmem:[%s167 + $0x270] sm:$0xff]
        %v288 = vld [vmem:[%s167 + $0x278] sm:$0xff]
        %v289 = vld [vmem:[%s167 + $0x280] sm:$0xff]
        %v290 = vld [vmem:[%s167 + $0x288] sm:$0xff]
        %v291 = vld [vmem:[%s167 + $0x290] sm:$0xff]
        %v292 = vld [vmem:[%s167 + $0x298] sm:$0xff]
        %v293 = vld [vmem:[%s167 + $0x2a0] sm:$0xff]
        %v294 = vld [vmem:[%s167 + $0x2a8] sm:$0xff]
        %v295 = vld [vmem:[%s167 + $0x2b0] sm:$0xff]
        %v296 = vld [vmem:[%s167 + $0x2b8] sm:$0xff]
        %v297 = vld [vmem:[%s167 + $0x2c0] sm:$0xff]
        %v298 = vld [vmem:[%s167 + $0x2c8] sm:$0xff]
        %v299 = vld [vmem:[%s167 + $0x2d0] sm:$0xff]
        %v300 = vld [vmem:[%s167 + $0x2d8] sm:$0xff]
        %v301 = vld [vmem:[%s167 + $0x2e0] sm:$0xff]
        %v302 = vld [vmem:[%s167 + $0x2e8] sm:$0xff]
        %v303 = vld [vmem:[%s167 + $0x2f0] sm:$0xff]
        %v304 = vld [vmem:[%s167 + $0x2f8] sm:$0xff]
        %v305 = vld [vmem:[%s167 + $0x300] sm:$0xff]
        %v306 = vld [vmem:[%s167 + $0x308] sm:$0xff]
        %v307 = vld [vmem:[%s167 + $0x310] sm:$0xff]
        %v308 = vld [vmem:[%s167 + $0x318] sm:$0xff]
        %v309 = vld [vmem:[%s167 + $0x320] sm:$0xff]
        %v310 = vld [vmem:[%s167 + $0x328] sm:$0xff]
        %v311 = vld [vmem:[%s167 + $0x330] sm:$0xff]
        %v312 = vld [vmem:[%s167 + $0x338] sm:$0xff]
        %v313 = vld [vmem:[%s167 + $0x340] sm:$0xff]
        %v314 = vld [vmem:[%s167 + $0x348] sm:$0xff]
        %v315 = vld [vmem:[%s167 + $0x350] sm:$0xff]
        %v316 = vld [vmem:[%s167 + $0x358] sm:$0xff]
        %v317 = vld [vmem:[%s167 + $0x360] sm:$0xff]
        %v318 = vld [vmem:[%s167 + $0x368] sm:$0xff]
        %v319 = vld [vmem:[%s167 + $0x370] sm:$0xff]
        %v320 = vld [vmem:[%s167 + $0x378] sm:$0xff]
        %v321 = vld [vmem:[%s167 + $0x380] sm:$0xff]
        %v322 = vld [vmem:[%s167 + $0x388] sm:$0xff]
        %v323 = vld [vmem:[%s167 + $0x390] sm:$0xff]
        %v324 = vld [vmem:[%s167 + $0x398] sm:$0xff]
        %v325 = vld [vmem:[%s167 + $0x3a0] sm:$0xff]
        %v326 = vld [vmem:[%s167 + $0x3a8] sm:$0xff]
        %v327 = vld [vmem:[%s167 + $0x3b0] sm:$0xff]
        %v328 = vld [vmem:[%s167 + $0x3b8] sm:$0xff]
        %v329 = vld [vmem:[%s167 + $0x3c0] sm:$0xff]
        %v330 = vld [vmem:[%s167 + $0x3c8] sm:$0xff]
        %v331 = vld [vmem:[%s167 + $0x3d0] sm:$0xff]
        %v332 = vld [vmem:[%s167 + $0x3d8] sm:$0xff]
        %v333 = vld [vmem:[%s167 + $0x3e0] sm:$0xff]
        %v334 = vld [vmem:[%s167 + $0x3e8] sm:$0xff]
        %v335 = vld [vmem:[%s167 + $0x3f0] sm:$0xff]
        %v336 = vld [vmem:[%s167 + $0x3f8] sm:$0xff]
        %v337 = vld [vmem:[%s167 + $0x400] sm:$0xff]
        %v338 = vld [vmem:[%s167 + $0x408] sm:$0xff]
        %v339 = vld [vmem:[%s167 + $0x410] sm:$0xff]
        %v340 = vld [vmem:[%s167 + $0x418] sm:$0xff]
        %v341 = vld [vmem:[%s167 + $0x420] sm:$0xff]
        %v342 = vld [vmem:[%s167 + $0x428] sm:$0xff]
        %v343 = vld [vmem:[%s167 + $0x430] sm:$0xff]
        %v344 = vld [vmem:[%s167 + $0x438] sm:$0xff]
        %v345 = vld [vmem:[%s167 + $0x440] sm:$0xff]
        %v346 = vld [vmem:[%s167 + $0x448] sm:$0xff]
        %v347 = vld [vmem:[%s167 + $0x450] sm:$0xff]
        %v348 = vld [vmem:[%s167 + $0x458] sm:$0xff]
        %v349 = vld [vmem:[%s167 + $0x460] sm:$0xff]
        %v350 = vld [vmem:[%s167 + $0x468] sm:$0xff]
        %v351 = vld [vmem:[%s167 + $0x470] sm:$0xff]
        %v352 = vld [vmem:[%s167 + $0x478] sm:$0xff]
        %v353 = vld [vmem:[%s167 + $0x480] sm:$0xff]
        %v354 = vld [vmem:[%s167 + $0x488] sm:$0xff]
        %v355 = vld [vmem:[%s167 + $0x490] sm:$0xff]
        %v356 = vld [vmem:[%s167 + $0x498] sm:$0xff]
        %v357 = vld [vmem:[%s167 + $0x4a0] sm:$0xff]
        %v358 = vld [vmem:[%s167 + $0x4a8] sm:$0xff]
        %v359 = vld [vmem:[%s167 + $0x4b0] sm:$0xff]
        %v360 = vld [vmem:[%s167 + $0x4b8] sm:$0xff]
        %v361 = vld [vmem:[%s167 + $0x4c0] sm:$0xff]
        %v362 = vld [vmem:[%s167 + $0x4c8] sm:$0xff]
        %v363 = vld [vmem:[%s167 + $0x4d0] sm:$0xff]
        %v364 = vld [vmem:[%s167 + $0x4d8] sm:$0xff]
        %v365 = vld [vmem:[%s167 + $0x4e0] sm:$0xff]
        %v366 = vld [vmem:[%s167 + $0x4e8] sm:$0xff]
        %v367 = vld [vmem:[%s167 + $0x4f0] sm:$0xff]
        %v368 = vld [vmem:[%s167 + $0x4f8] sm:$0xff]
        %v369 = vld [vmem:[%s167 + $0x500] sm:$0xff]
        %v370 = vld [vmem:[%s167 + $0x508] sm:$0xff]
        %v371 = vld [vmem:[%s167 + $0x510] sm:$0xff]
        %v372 = vld [vmem:[%s167 + $0x518] sm:$0xff]
        %v373 = vld [vmem:[%s167 + $0x520] sm:$0xff]
        %v374 = vld [vmem:[%s167 + $0x528] sm:$0xff]
        %v375 = vld [vmem:[%s167 + $0x530] sm:$0xff]
        %v376 = vld [vmem:[%s167 + $0x538] sm:$0xff]
        %v377 = vld [vmem:[%s167 + $0x540] sm:$0xff]
        %v378 = vld [vmem:[%s167 + $0x548] sm:$0xff]
        %v379 = vld [vmem:[%s167 + $0x550] sm:$0xff]
        %v380 = vld [vmem:[%s167 + $0x558] sm:$0xff]
        %v381 = vld [vmem:[%s167 + $0x560] sm:$0xff]
        %v382 = vld [vmem:[%s167 + $0x568] sm:$0xff]
        %v383 = vld [vmem:[%s167 + $0x570] sm:$0xff]
        %v384 = vld [vmem:[%s167 + $0x578] sm:$0xff]
        %v385 = vld [vmem:[%s167 + $0x580] sm:$0xff]
        %v386 = vld [vmem:[%s167 + $0x588] sm:$0xff]
        %v387 = vld [vmem:[%s167 + $0x590] sm:$0xff]
        %v388 = vld [vmem:[%s167 + $0x598] sm:$0xff]
        %v389 = vld [vmem:[%s167 + $0x5a0] sm:$0xff]
        %v390 = vld [vmem:[%s167 + $0x5a8] sm:$0xff]
        %v391 = vld [vmem:[%s167 + $0x5b0] sm:$0xff]
        %v392 = vld [vmem:[%s167 + $0x5b8] sm:$0xff]
        %v393 = vld [vmem:[%s167 + $0x5c0] sm:$0xff]
        %v394 = vld [vmem:[%s167 + $0x5c8] sm:$0xff]
        %v395 = vld [vmem:[%s167 + $0x5d0] sm:$0xff]
        %v396 = vld [vmem:[%s167 + $0x5d8] sm:$0xff]
        %v397 = vld [vmem:[%s167 + $0x5e0] sm:$0xff]
        %v398 = vld [vmem:[%s167 + $0x5e8] sm:$0xff]
        %v399 = vld [vmem:[%s167 + $0x5f0] sm:$0xff]
        %v400 = vld [vmem:[%s167 + $0x5f8] sm:$0xff]
        %v401 = vld [vmem:[%s167 + $0x600] sm:$0xff]
        %v402 = vld [vmem:[%s167 + $0x608] sm:$0xff]
        %v403 = vld [vmem:[%s167 + $0x610] sm:$0xff]
        %v404 = vld [vmem:[%s167 + $0x618] sm:$0xff]
        %v405 = vld [vmem:[%s167 + $0x620] sm:$0xff]
        %v406 = vld [vmem:[%s167 + $0x628] sm:$0xff]
        %v407 = vld [vmem:[%s167 + $0x630] sm:$0xff]
        %v408 = vld [vmem:[%s167 + $0x638] sm:$0xff]
        %v409 = vld [vmem:[%s167 + $0x640] sm:$0xff]
        %v410 = vld [vmem:[%s167 + $0x648] sm:$0xff]
        %v411 = vld [vmem:[%s167 + $0x650] sm:$0xff]
        %v412 = vld [vmem:[%s167 + $0x658] sm:$0xff]
        %v413 = vld [vmem:[%s167 + $0x660] sm:$0xff]
        %v414 = vld [vmem:[%s167 + $0x668] sm:$0xff]
        %v415 = vld [vmem:[%s167 + $0x670] sm:$0xff]
        %v416 = vld [vmem:[%s167 + $0x678] sm:$0xff]
        %v417 = vld [vmem:[%s167 + $0x680] sm:$0xff]
        %v418 = vld [vmem:[%s167 + $0x688] sm:$0xff]
        %v419 = vld [vmem:[%s167 + $0x690] sm:$0xff]
        %v420 = vld [vmem:[%s167 + $0x698] sm:$0xff]
        %v421 = vld [vmem:[%s167 + $0x6a0] sm:$0xff]
        %v422 = vld [vmem:[%s167 + $0x6a8] sm:$0xff]
        %v423 = vld [vmem:[%s167 + $0x6b0] sm:$0xff]
        %v424 = vld [vmem:[%s167 + $0x6b8] sm:$0xff]
        %v425 = vld [vmem:[%s167 + $0x6c0] sm:$0xff]
        %v426 = vld [vmem:[%s167 + $0x6c8] sm:$0xff]
        %v427 = vld [vmem:[%s167 + $0x6d0] sm:$0xff]
        %v428 = vld [vmem:[%s167 + $0x6d8] sm:$0xff]
        %v429 = vld [vmem:[%s167 + $0x6e0] sm:$0xff]
        %v430 = vld [vmem:[%s167 + $0x6e8] sm:$0xff]
        %v431 = vld [vmem:[%s167 + $0x6f0] sm:$0xff]
        %v432 = vld [vmem:[%s167 + $0x6f8] sm:$0xff]
        %v433 = vld [vmem:[%s167 + $0x700] sm:$0xff]
        %v434 = vld [vmem:[%s167 + $0x708] sm:$0xff]
        %v435 = vld [vmem:[%s167 + $0x710] sm:$0xff]
        %v436 = vld [vmem:[%s167 + $0x718] sm:$0xff]
        %v437 = vld [vmem:[%s167 + $0x720] sm:$0xff]
        %v438 = vld [vmem:[%s167 + $0x728] sm:$0xff]
        %v439 = vld [vmem:[%s167 + $0x730] sm:$0xff]
        %v440 = vld [vmem:[%s167 + $0x738] sm:$0xff]
        %v441 = vld [vmem:[%s167 + $0x740] sm:$0xff]
        %v442 = vld [vmem:[%s167 + $0x748] sm:$0xff]
        %v443 = vld [vmem:[%s167 + $0x750] sm:$0xff]
        %v444 = vld [vmem:[%s167 + $0x758] sm:$0xff]
        %v445 = vld [vmem:[%s167 + $0x760] sm:$0xff]
        %v446 = vld [vmem:[%s167 + $0x768] sm:$0xff]
        %v447 = vld [vmem:[%s167 + $0x770] sm:$0xff]
        %v448 = vld [vmem:[%s167 + $0x778] sm:$0xff]
        %v449 = vld [vmem:[%s167 + $0x780] sm:$0xff]
        %v450 = vld [vmem:[%s167 + $0x788] sm:$0xff]
        %v451 = vld [vmem:[%s167 + $0x790] sm:$0xff]
        %v452 = vld [vmem:[%s167 + $0x798] sm:$0xff]
        %v453 = vld [vmem:[%s167 + $0x7a0] sm:$0xff]
        %v454 = vld [vmem:[%s167 + $0x7a8] sm:$0xff]
        %v455 = vld [vmem:[%s167 + $0x7b0] sm:$0xff]
        %v456 = vld [vmem:[%s167 + $0x7b8] sm:$0xff]
        %v457 = vld [vmem:[%s167 + $0x7c0] sm:$0xff]
        %v458 = vld [vmem:[%s167 + $0x7c8] sm:$0xff]
        %v459 = vld [vmem:[%s167 + $0x7d0] sm:$0xff]
        %v460 = vld [vmem:[%s167 + $0x7d8] sm:$0xff]
        %v461 = vld [vmem:[%s167 + $0x7e0] sm:$0xff]
        %v462 = vld [vmem:[%s167 + $0x7e8] sm:$0xff]
        %v463 = vld [vmem:[%s167 + $0x7f0] sm:$0xff]
        %v464 = vld [vmem:[%s167 + $0x7f8] sm:$0xff]
        %v465 = vld [vmem:[%s176] sm:$0xff]
        %v466 = vld [vmem:[%s176 + $0x8] sm:$0xff]
        %v467 = vld [vmem:[%s176 + $0x10] sm:$0xff]
        %v468 = vld [vmem:[%s176 + $0x18] sm:$0xff]
        %v469 = vld [vmem:[%s176 + $0x20] sm:$0xff]
        %v470 = vld [vmem:[%s176 + $0x28] sm:$0xff]
        %v471 = vld [vmem:[%s176 + $0x30] sm:$0xff]
        %v472 = vld [vmem:[%s176 + $0x38] sm:$0xff]
        %v473 = vld [vmem:[%s176 + $0x40] sm:$0xff]
        %v474 = vld [vmem:[%s176 + $0x48] sm:$0xff]
        %v475 = vld [vmem:[%s176 + $0x50] sm:$0xff]
        %v476 = vld [vmem:[%s176 + $0x58] sm:$0xff]
        %v477 = vld [vmem:[%s176 + $0x60] sm:$0xff]
        %v478 = vld [vmem:[%s176 + $0x68] sm:$0xff]
        %v479 = vld [vmem:[%s176 + $0x70] sm:$0xff]
        %v480 = vld [vmem:[%s176 + $0x78] sm:$0xff]
        %v481 = vld [vmem:[%s176 + $0x80] sm:$0xff]
        %v482 = vld [vmem:[%s176 + $0x88] sm:$0xff]
        %v483 = vld [vmem:[%s176 + $0x90] sm:$0xff]
        %v484 = vld [vmem:[%s176 + $0x98] sm:$0xff]
        %v485 = vld [vmem:[%s176 + $0xa0] sm:$0xff]
        %v486 = vld [vmem:[%s176 + $0xa8] sm:$0xff]
        %v487 = vld [vmem:[%s176 + $0xb0] sm:$0xff]
        %v488 = vld [vmem:[%s176 + $0xb8] sm:$0xff]
        %v489 = vld [vmem:[%s176 + $0xc0] sm:$0xff]
        %v490 = vld [vmem:[%s176 + $0xc8] sm:$0xff]
        %v491 = vld [vmem:[%s176 + $0xd0] sm:$0xff]
        %v492 = vld [vmem:[%s176 + $0xd8] sm:$0xff]
        %v493 = vld [vmem:[%s176 + $0xe0] sm:$0xff]
        %v494 = vld [vmem:[%s176 + $0xe8] sm:$0xff]
        %v495 = vld [vmem:[%s176 + $0xf0] sm:$0xff]
        %v496 = vld [vmem:[%s176 + $0xf8] sm:$0xff]
        %v497 = vld [vmem:[%s176 + $0x100] sm:$0xff]
        %v498 = vld [vmem:[%s176 + $0x108] sm:$0xff]
        %v499 = vld [vmem:[%s176 + $0x110] sm:$0xff]
        %v500 = vld [vmem:[%s176 + $0x118] sm:$0xff]
        %v501 = vld [vmem:[%s176 + $0x120] sm:$0xff]
        %v502 = vld [vmem:[%s176 + $0x128] sm:$0xff]
        %v503 = vld [vmem:[%s176 + $0x130] sm:$0xff]
        %v504 = vld [vmem:[%s176 + $0x138] sm:$0xff]
        %v505 = vld [vmem:[%s176 + $0x140] sm:$0xff]
        %v506 = vld [vmem:[%s176 + $0x148] sm:$0xff]
        %v507 = vld [vmem:[%s176 + $0x150] sm:$0xff]
        %v508 = vld [vmem:[%s176 + $0x158] sm:$0xff]
        %v509 = vld [vmem:[%s176 + $0x160] sm:$0xff]
        %v510 = vld [vmem:[%s176 + $0x168] sm:$0xff]
        %v511 = vld [vmem:[%s176 + $0x170] sm:$0xff]
        %v512 = vld [vmem:[%s176 + $0x178] sm:$0xff]
        %v513 = vld [vmem:[%s176 + $0x180] sm:$0xff]
        %v514 = vld [vmem:[%s176 + $0x188] sm:$0xff]
        %v515 = vld [vmem:[%s176 + $0x190] sm:$0xff]
        %v516 = vld [vmem:[%s176 + $0x198] sm:$0xff]
        %v517 = vld [vmem:[%s176 + $0x1a0] sm:$0xff]
        %v518 = vld [vmem:[%s176 + $0x1a8] sm:$0xff]
        %v519 = vld [vmem:[%s176 + $0x1b0] sm:$0xff]
        %v520 = vld [vmem:[%s176 + $0x1b8] sm:$0xff]
        %v521 = vld [vmem:[%s176 + $0x1c0] sm:$0xff]
        %v522 = vld [vmem:[%s176 + $0x1c8] sm:$0xff]
        %v523 = vld [vmem:[%s176 + $0x1d0] sm:$0xff]
        %v524 = vld [vmem:[%s176 + $0x1d8] sm:$0xff]
        %v525 = vld [vmem:[%s176 + $0x1e0] sm:$0xff]
        %v526 = vld [vmem:[%s176 + $0x1e8] sm:$0xff]
        %v527 = vld [vmem:[%s176 + $0x1f0] sm:$0xff]
        %v528 = vld [vmem:[%s176 + $0x1f8] sm:$0xff]
        %v529 = vld [vmem:[%s176 + $0x200] sm:$0xff]
        %v530 = vld [vmem:[%s176 + $0x208] sm:$0xff]
        %v531 = vld [vmem:[%s176 + $0x210] sm:$0xff]
        %v532 = vld [vmem:[%s176 + $0x218] sm:$0xff]
        %v533 = vld [vmem:[%s176 + $0x220] sm:$0xff]
        %v534 = vld [vmem:[%s176 + $0x228] sm:$0xff]
        %v535 = vld [vmem:[%s176 + $0x230] sm:$0xff]
        %v536 = vld [vmem:[%s176 + $0x238] sm:$0xff]
        %v537 = vld [vmem:[%s176 + $0x240] sm:$0xff]
        %v538 = vld [vmem:[%s176 + $0x248] sm:$0xff]
        %v539 = vld [vmem:[%s176 + $0x250] sm:$0xff]
        %v540 = vld [vmem:[%s176 + $0x258] sm:$0xff]
        %v541 = vld [vmem:[%s176 + $0x260] sm:$0xff]
        %v542 = vld [vmem:[%s176 + $0x268] sm:$0xff]
        %v543 = vld [vmem:[%s176 + $0x270] sm:$0xff]
        %v544 = vld [vmem:[%s176 + $0x278] sm:$0xff]
        %v545 = vld [vmem:[%s176 + $0x280] sm:$0xff]
        %v546 = vld [vmem:[%s176 + $0x288] sm:$0xff]
        %v547 = vld [vmem:[%s176 + $0x290] sm:$0xff]
        %v548 = vld [vmem:[%s176 + $0x298] sm:$0xff]
        %v549 = vld [vmem:[%s176 + $0x2a0] sm:$0xff]
        %v550 = vld [vmem:[%s176 + $0x2a8] sm:$0xff]
        %v551 = vld [vmem:[%s176 + $0x2b0] sm:$0xff]
        %v552 = vld [vmem:[%s176 + $0x2b8] sm:$0xff]
        %v553 = vld [vmem:[%s176 + $0x2c0] sm:$0xff]
        %v554 = vld [vmem:[%s176 + $0x2c8] sm:$0xff]
        %v555 = vld [vmem:[%s176 + $0x2d0] sm:$0xff]
        %v556 = vld [vmem:[%s176 + $0x2d8] sm:$0xff]
        %v557 = vld [vmem:[%s176 + $0x2e0] sm:$0xff]
        %v558 = vld [vmem:[%s176 + $0x2e8] sm:$0xff]
        %v559 = vld [vmem:[%s176 + $0x2f0] sm:$0xff]
        %v560 = vld [vmem:[%s176 + $0x2f8] sm:$0xff]
        %v561 = vld [vmem:[%s176 + $0x300] sm:$0xff]
        %v562 = vld [vmem:[%s176 + $0x308] sm:$0xff]
        %v563 = vld [vmem:[%s176 + $0x310] sm:$0xff]
        %v564 = vld [vmem:[%s176 + $0x318] sm:$0xff]
        %v565 = vld [vmem:[%s176 + $0x320] sm:$0xff]
        %v566 = vld [vmem:[%s176 + $0x328] sm:$0xff]
        %v567 = vld [vmem:[%s176 + $0x330] sm:$0xff]
        %v568 = vld [vmem:[%s176 + $0x338] sm:$0xff]
        %v569 = vld [vmem:[%s176 + $0x340] sm:$0xff]
        %v570 = vld [vmem:[%s176 + $0x348] sm:$0xff]
        %v571 = vld [vmem:[%s176 + $0x350] sm:$0xff]
        %v572 = vld [vmem:[%s176 + $0x358] sm:$0xff]
        %v573 = vld [vmem:[%s176 + $0x360] sm:$0xff]
        %v574 = vld [vmem:[%s176 + $0x368] sm:$0xff]
        %v575 = vld [vmem:[%s176 + $0x370] sm:$0xff]
        %v576 = vld [vmem:[%s176 + $0x378] sm:$0xff]
        %v577 = vld [vmem:[%s176 + $0x380] sm:$0xff]
        %v578 = vld [vmem:[%s176 + $0x388] sm:$0xff]
        %v579 = vld [vmem:[%s176 + $0x390] sm:$0xff]
        %v580 = vld [vmem:[%s176 + $0x398] sm:$0xff]
        %v581 = vld [vmem:[%s176 + $0x3a0] sm:$0xff]
        %v582 = vld [vmem:[%s176 + $0x3a8] sm:$0xff]
        %v583 = vld [vmem:[%s176 + $0x3b0] sm:$0xff]
        %v584 = vld [vmem:[%s176 + $0x3b8] sm:$0xff]
        %v585 = vld [vmem:[%s176 + $0x3c0] sm:$0xff]
        %v586 = vld [vmem:[%s176 + $0x3c8] sm:$0xff]
        %v587 = vld [vmem:[%s176 + $0x3d0] sm:$0xff]
        %v588 = vld [vmem:[%s176 + $0x3d8] sm:$0xff]
        %v589 = vld [vmem:[%s176 + $0x3e0] sm:$0xff]
        %v590 = vld [vmem:[%s176 + $0x3e8] sm:$0xff]
        %v591 = vld [vmem:[%s176 + $0x3f0] sm:$0xff]
        %v592 = vld [vmem:[%s176 + $0x3f8] sm:$0xff]
        %v593 = vld [vmem:[%s176 + $0x400] sm:$0xff]
        %v594 = vld [vmem:[%s176 + $0x408] sm:$0xff]
        %v595 = vld [vmem:[%s176 + $0x410] sm:$0xff]
        %v596 = vld [vmem:[%s176 + $0x418] sm:$0xff]
        %v597 = vld [vmem:[%s176 + $0x420] sm:$0xff]
        %v598 = vld [vmem:[%s176 + $0x428] sm:$0xff]
        %v599 = vld [vmem:[%s176 + $0x430] sm:$0xff]
        %v600 = vld [vmem:[%s176 + $0x438] sm:$0xff]
        %v601 = vld [vmem:[%s176 + $0x440] sm:$0xff]
        %v602 = vld [vmem:[%s176 + $0x448] sm:$0xff]
        %v603 = vld [vmem:[%s176 + $0x450] sm:$0xff]
        %v604 = vld [vmem:[%s176 + $0x458] sm:$0xff]
        %v605 = vld [vmem:[%s176 + $0x460] sm:$0xff]
        %v606 = vld [vmem:[%s176 + $0x468] sm:$0xff]
        %v607 = vld [vmem:[%s176 + $0x470] sm:$0xff]
        %v608 = vld [vmem:[%s176 + $0x478] sm:$0xff]
        %v609 = vld [vmem:[%s176 + $0x480] sm:$0xff]
        %v610 = vld [vmem:[%s176 + $0x488] sm:$0xff]
        %v611 = vld [vmem:[%s176 + $0x490] sm:$0xff]
        %v612 = vld [vmem:[%s176 + $0x498] sm:$0xff]
        %v613 = vld [vmem:[%s176 + $0x4a0] sm:$0xff]
        %v614 = vld [vmem:[%s176 + $0x4a8] sm:$0xff]
        %v615 = vld [vmem:[%s176 + $0x4b0] sm:$0xff]
        %v616 = vld [vmem:[%s176 + $0x4b8] sm:$0xff]
        %v617 = vld [vmem:[%s176 + $0x4c0] sm:$0xff]
        %v618 = vld [vmem:[%s176 + $0x4c8] sm:$0xff]
        %v619 = vld [vmem:[%s176 + $0x4d0] sm:$0xff]
        %v620 = vld [vmem:[%s176 + $0x4d8] sm:$0xff]
        %v621 = vld [vmem:[%s176 + $0x4e0] sm:$0xff]
        %v622 = vld [vmem:[%s176 + $0x4e8] sm:$0xff]
        %v623 = vld [vmem:[%s176 + $0x4f0] sm:$0xff]
        %v624 = vld [vmem:[%s176 + $0x4f8] sm:$0xff]
        %v625 = vld [vmem:[%s176 + $0x500] sm:$0xff]
        %v626 = vld [vmem:[%s176 + $0x508] sm:$0xff]
        %v627 = vld [vmem:[%s176 + $0x510] sm:$0xff]
        %v628 = vld [vmem:[%s176 + $0x518] sm:$0xff]
        %v629 = vld [vmem:[%s176 + $0x520] sm:$0xff]
        %v630 = vld [vmem:[%s176 + $0x528] sm:$0xff]
        %v631 = vld [vmem:[%s176 + $0x530] sm:$0xff]
        %v632 = vld [vmem:[%s176 + $0x538] sm:$0xff]
        %v633 = vld [vmem:[%s176 + $0x540] sm:$0xff]
        %v634 = vld [vmem:[%s176 + $0x548] sm:$0xff]
        %v635 = vld [vmem:[%s176 + $0x550] sm:$0xff]
        %v636 = vld [vmem:[%s176 + $0x558] sm:$0xff]
        %v637 = vld [vmem:[%s176 + $0x560] sm:$0xff]
        %v638 = vld [vmem:[%s176 + $0x568] sm:$0xff]
        %v639 = vld [vmem:[%s176 + $0x570] sm:$0xff]
        %v640 = vld [vmem:[%s176 + $0x578] sm:$0xff]
        %v641 = vld [vmem:[%s176 + $0x580] sm:$0xff]
        %v642 = vld [vmem:[%s176 + $0x588] sm:$0xff]
        %v643 = vld [vmem:[%s176 + $0x590] sm:$0xff]
        %v644 = vld [vmem:[%s176 + $0x598] sm:$0xff]
        %v645 = vld [vmem:[%s176 + $0x5a0] sm:$0xff]
        %v646 = vld [vmem:[%s176 + $0x5a8] sm:$0xff]
        %v647 = vld [vmem:[%s176 + $0x5b0] sm:$0xff]
        %v648 = vld [vmem:[%s176 + $0x5b8] sm:$0xff]
        %v649 = vld [vmem:[%s176 + $0x5c0] sm:$0xff]
        %v650 = vld [vmem:[%s176 + $0x5c8] sm:$0xff]
        %v651 = vld [vmem:[%s176 + $0x5d0] sm:$0xff]
        %v652 = vld [vmem:[%s176 + $0x5d8] sm:$0xff]
        %v653 = vld [vmem:[%s176 + $0x5e0] sm:$0xff]
        %v654 = vld [vmem:[%s176 + $0x5e8] sm:$0xff]
        %v655 = vld [vmem:[%s176 + $0x5f0] sm:$0xff]
        %v656 = vld [vmem:[%s176 + $0x5f8] sm:$0xff]
        %v657 = vld [vmem:[%s176 + $0x600] sm:$0xff]
        %v658 = vld [vmem:[%s176 + $0x608] sm:$0xff]
        %v659 = vld [vmem:[%s176 + $0x610] sm:$0xff]
        %v660 = vld [vmem:[%s176 + $0x618] sm:$0xff]
        %v661 = vld [vmem:[%s176 + $0x620] sm:$0xff]
        %v662 = vld [vmem:[%s176 + $0x628] sm:$0xff]
        %v663 = vld [vmem:[%s176 + $0x630] sm:$0xff]
        %v664 = vld [vmem:[%s176 + $0x638] sm:$0xff]
        %v665 = vld [vmem:[%s176 + $0x640] sm:$0xff]
        %v666 = vld [vmem:[%s176 + $0x648] sm:$0xff]
        %v667 = vld [vmem:[%s176 + $0x650] sm:$0xff]
        %v668 = vld [vmem:[%s176 + $0x658] sm:$0xff]
        %v669 = vld [vmem:[%s176 + $0x660] sm:$0xff]
        %v670 = vld [vmem:[%s176 + $0x668] sm:$0xff]
        %v671 = vld [vmem:[%s176 + $0x670] sm:$0xff]
        %v672 = vld [vmem:[%s176 + $0x678] sm:$0xff]
        %v673 = vld [vmem:[%s176 + $0x680] sm:$0xff]
        %v674 = vld [vmem:[%s176 + $0x688] sm:$0xff]
        %v675 = vld [vmem:[%s176 + $0x690] sm:$0xff]
        %v676 = vld [vmem:[%s176 + $0x698] sm:$0xff]
        %v677 = vld [vmem:[%s176 + $0x6a0] sm:$0xff]
        %v678 = vld [vmem:[%s176 + $0x6a8] sm:$0xff]
        %v679 = vld [vmem:[%s176 + $0x6b0] sm:$0xff]
        %v680 = vld [vmem:[%s176 + $0x6b8] sm:$0xff]
        %v681 = vld [vmem:[%s176 + $0x6c0] sm:$0xff]
        %v682 = vld [vmem:[%s176 + $0x6c8] sm:$0xff]
        %v683 = vld [vmem:[%s176 + $0x6d0] sm:$0xff]
        %v684 = vld [vmem:[%s176 + $0x6d8] sm:$0xff]
        %v685 = vld [vmem:[%s176 + $0x6e0] sm:$0xff]
        %v686 = vld [vmem:[%s176 + $0x6e8] sm:$0xff]
        %v687 = vld [vmem:[%s176 + $0x6f0] sm:$0xff]
        %v688 = vld [vmem:[%s176 + $0x6f8] sm:$0xff]
        %v689 = vld [vmem:[%s176 + $0x700] sm:$0xff]
        %v690 = vld [vmem:[%s176 + $0x708] sm:$0xff]
        %v691 = vld [vmem:[%s176 + $0x710] sm:$0xff]
        %v692 = vld [vmem:[%s176 + $0x718] sm:$0xff]
        %v693 = vld [vmem:[%s176 + $0x720] sm:$0xff]
        %v694 = vld [vmem:[%s176 + $0x728] sm:$0xff]
        %v695 = vld [vmem:[%s176 + $0x730] sm:$0xff]
        %v696 = vld [vmem:[%s176 + $0x738] sm:$0xff]
        %v697 = vld [vmem:[%s176 + $0x740] sm:$0xff]
        %v698 = vld [vmem:[%s176 + $0x748] sm:$0xff]
        %v699 = vld [vmem:[%s176 + $0x750] sm:$0xff]
        %v700 = vld [vmem:[%s176 + $0x758] sm:$0xff]
        %v701 = vld [vmem:[%s176 + $0x760] sm:$0xff]
        %v702 = vld [vmem:[%s176 + $0x768] sm:$0xff]
        %v703 = vld [vmem:[%s176 + $0x770] sm:$0xff]
        %v704 = vld [vmem:[%s176 + $0x778] sm:$0xff]
        %v705 = vld [vmem:[%s176 + $0x780] sm:$0xff]
        %v706 = vld [vmem:[%s176 + $0x788] sm:$0xff]
        %v707 = vld [vmem:[%s176 + $0x790] sm:$0xff]
        %v708 = vld [vmem:[%s176 + $0x798] sm:$0xff]
        %v709 = vld [vmem:[%s176 + $0x7a0] sm:$0xff]
        %v710 = vld [vmem:[%s176 + $0x7a8] sm:$0xff]
        %v711 = vld [vmem:[%s176 + $0x7b0] sm:$0xff]
        %v712 = vld [vmem:[%s176 + $0x7b8] sm:$0xff]
        %v713 = vld [vmem:[%s176 + $0x7c0] sm:$0xff]
        %v714 = vld [vmem:[%s176 + $0x7c8] sm:$0xff]
        %v715 = vld [vmem:[%s176 + $0x7d0] sm:$0xff]
        %v716 = vld [vmem:[%s176 + $0x7d8] sm:$0xff]
        %v717 = vld [vmem:[%s176 + $0x7e0] sm:$0xff]
        %v718 = vld [vmem:[%s176 + $0x7e8] sm:$0xff]
        %v719 = vld [vmem:[%s176 + $0x7f0] sm:$0xff]
        %v720 = vld [vmem:[%s176 + $0x7f8] sm:$0xff]
        %v721 = vstv %s207
        %v722 = vsub.f32 %v465, %v721
        %v723 = vsub.f32 %v466, %v721
        %v724 = vsub.f32 %v467, %v721
        %v725 = vsub.f32 %v468, %v721
        %v726 = vsub.f32 %v469, %v721
        %v727 = vsub.f32 %v470, %v721
        %v728 = vsub.f32 %v471, %v721
        %v729 = vsub.f32 %v472, %v721
        %v730 = vsub.f32 %v473, %v721
        %v731 = vsub.f32 %v474, %v721
        %v732 = vsub.f32 %v475, %v721
        %v733 = vsub.f32 %v476, %v721
        %v734 = vsub.f32 %v477, %v721
        %v735 = vsub.f32 %v478, %v721
        %v736 = vsub.f32 %v479, %v721
        %v737 = vsub.f32 %v480, %v721
        %v738 = vsub.f32 %v481, %v721
        %v739 = vsub.f32 %v482, %v721
        %v740 = vsub.f32 %v483, %v721
        %v741 = vsub.f32 %v484, %v721
        %v742 = vsub.f32 %v485, %v721
        %v743 = vsub.f32 %v486, %v721
        %v744 = vsub.f32 %v487, %v721
        %v745 = vsub.f32 %v488, %v721
        %v746 = vsub.f32 %v489, %v721
        %v747 = vsub.f32 %v490, %v721
        %v748 = vsub.f32 %v491, %v721
        %v749 = vsub.f32 %v492, %v721
        %v750 = vsub.f32 %v493, %v721
        %v751 = vsub.f32 %v494, %v721
        %v752 = vsub.f32 %v495, %v721
        %v753 = vsub.f32 %v496, %v721
        %v754 = vsub.f32 %v497, %v721
        %v755 = vsub.f32 %v498, %v721
        %v756 = vsub.f32 %v499, %v721
        %v757 = vsub.f32 %v500, %v721
        %v758 = vsub.f32 %v501, %v721
        %v759 = vsub.f32 %v502, %v721
        %v760 = vsub.f32 %v503, %v721
        %v761 = vsub.f32 %v504, %v721
        %v762 = vsub.f32 %v505, %v721
        %v763 = vsub.f32 %v506, %v721
        %v764 = vsub.f32 %v507, %v721
        %v765 = vsub.f32 %v508, %v721
        %v766 = vsub.f32 %v509, %v721
        %v767 = vsub.f32 %v510, %v721
        %v768 = vsub.f32 %v511, %v721
        %v769 = vsub.f32 %v512, %v721
        %v770 = vsub.f32 %v513, %v721
        %v771 = vsub.f32 %v514, %v721
        %v772 = vsub.f32 %v515, %v721
        %v773 = vsub.f32 %v516, %v721
        %v774 = vsub.f32 %v517, %v721
        %v775 = vsub.f32 %v518, %v721
        %v776 = vsub.f32 %v519, %v721
        %v777 = vsub.f32 %v520, %v721
        %v778 = vsub.f32 %v521, %v721
        %v779 = vsub.f32 %v522, %v721
        %v780 = vsub.f32 %v523, %v721
        %v781 = vsub.f32 %v524, %v721
        %v782 = vsub.f32 %v525, %v721
        %v783 = vsub.f32 %v526, %v721
        %v784 = vsub.f32 %v527, %v721
        %v785 = vsub.f32 %v528, %v721
        %v786 = vsub.f32 %v529, %v721
        %v787 = vsub.f32 %v530, %v721
        %v788 = vsub.f32 %v531, %v721
        %v789 = vsub.f32 %v532, %v721
        %v790 = vsub.f32 %v533, %v721
        %v791 = vsub.f32 %v534, %v721
        %v792 = vsub.f32 %v535, %v721
        %v793 = vsub.f32 %v536, %v721
        %v794 = vsub.f32 %v537, %v721
        %v795 = vsub.f32 %v538, %v721
        %v796 = vsub.f32 %v539, %v721
        %v797 = vsub.f32 %v540, %v721
        %v798 = vsub.f32 %v541, %v721
        %v799 = vsub.f32 %v542, %v721
        %v800 = vsub.f32 %v543, %v721
        %v801 = vsub.f32 %v544, %v721
        %v802 = vsub.f32 %v545, %v721
        %v803 = vsub.f32 %v546, %v721
        %v804 = vsub.f32 %v547, %v721
        %v805 = vsub.f32 %v548, %v721
        %v806 = vsub.f32 %v549, %v721
        %v807 = vsub.f32 %v550, %v721
        %v808 = vsub.f32 %v551, %v721
        %v809 = vsub.f32 %v552, %v721
        %v810 = vsub.f32 %v553, %v721
        %v811 = vsub.f32 %v554, %v721
        %v812 = vsub.f32 %v555, %v721
        %v813 = vsub.f32 %v556, %v721
        %v814 = vsub.f32 %v557, %v721
        %v815 = vsub.f32 %v558, %v721
        %v816 = vsub.f32 %v559, %v721
        %v817 = vsub.f32 %v560, %v721
        %v818 = vsub.f32 %v561, %v721
        %v819 = vsub.f32 %v562, %v721
        %v820 = vsub.f32 %v563, %v721
        %v821 = vsub.f32 %v564, %v721
        %v822 = vsub.f32 %v565, %v721
        %v823 = vsub.f32 %v566, %v721
        %v824 = vsub.f32 %v567, %v721
        %v825 = vsub.f32 %v568, %v721
        %v826 = vsub.f32 %v569, %v721
        %v827 = vsub.f32 %v570, %v721
        %v828 = vsub.f32 %v571, %v721
        %v829 = vsub.f32 %v572, %v721
        %v830 = vsub.f32 %v573, %v721
        %v831 = vsub.f32 %v574, %v721
        %v832 = vsub.f32 %v575, %v721
        %v833 = vsub.f32 %v576, %v721
        %v834 = vsub.f32 %v577, %v721
        %v835 = vsub.f32 %v578, %v721
        %v836 = vsub.f32 %v579, %v721
        %v837 = vsub.f32 %v580, %v721
        %v838 = vsub.f32 %v581, %v721
        %v839 = vsub.f32 %v582, %v721
        %v840 = vsub.f32 %v583, %v721
        %v841 = vsub.f32 %v584, %v721
        %v842 = vsub.f32 %v585, %v721
        %v843 = vsub.f32 %v586, %v721
        %v844 = vsub.f32 %v587, %v721
        %v845 = vsub.f32 %v588, %v721
        %v846 = vsub.f32 %v589, %v721
        %v847 = vsub.f32 %v590, %v721
        %v848 = vsub.f32 %v591, %v721
        %v849 = vsub.f32 %v592, %v721
        %v850 = vsub.f32 %v593, %v721
        %v851 = vsub.f32 %v594, %v721
        %v852 = vsub.f32 %v595, %v721
        %v853 = vsub.f32 %v596, %v721
        %v854 = vsub.f32 %v597, %v721
        %v855 = vsub.f32 %v598, %v721
        %v856 = vsub.f32 %v599, %v721
        %v857 = vsub.f32 %v600, %v721
        %v858 = vsub.f32 %v601, %v721
        %v859 = vsub.f32 %v602, %v721
        %v860 = vsub.f32 %v603, %v721
        %v861 = vsub.f32 %v604, %v721
        %v862 = vsub.f32 %v605, %v721
        %v863 = vsub.f32 %v606, %v721
        %v864 = vsub.f32 %v607, %v721
        %v865 = vsub.f32 %v608, %v721
        %v866 = vsub.f32 %v609, %v721
        %v867 = vsub.f32 %v610, %v721
        %v868 = vsub.f32 %v611, %v721
        %v869 = vsub.f32 %v612, %v721
        %v870 = vsub.f32 %v613, %v721
        %v871 = vsub.f32 %v614, %v721
        %v872 = vsub.f32 %v615, %v721
        %v873 = vsub.f32 %v616, %v721
        %v874 = vsub.f32 %v617, %v721
        %v875 = vsub.f32 %v618, %v721
        %v876 = vsub.f32 %v619, %v721
        %v877 = vsub.f32 %v620, %v721
        %v878 = vsub.f32 %v621, %v721
        %v879 = vsub.f32 %v622, %v721
        %v880 = vsub.f32 %v623, %v721
        %v881 = vsub.f32 %v624, %v721
        %v882 = vsub.f32 %v625, %v721
        %v883 = vsub.f32 %v626, %v721
        %v884 = vsub.f32 %v627, %v721
        %v885 = vsub.f32 %v628, %v721
        %v886 = vsub.f32 %v629, %v721
        %v887 = vsub.f32 %v630, %v721
        %v888 = vsub.f32 %v631, %v721
        %v889 = vsub.f32 %v632, %v721
        %v890 = vsub.f32 %v633, %v721
        %v891 = vsub.f32 %v634, %v721
        %v892 = vsub.f32 %v635, %v721
        %v893 = vsub.f32 %v636, %v721
        %v894 = vsub.f32 %v637, %v721
        %v895 = vsub.f32 %v638, %v721
        %v896 = vsub.f32 %v639, %v721
        %v897 = vsub.f32 %v640, %v721
        %v898 = vsub.f32 %v641, %v721
        %v899 = vsub.f32 %v642, %v721
        %v900 = vsub.f32 %v643, %v721
        %v901 = vsub.f32 %v644, %v721
        %v902 = vsub.f32 %v645, %v721
        %v903 = vsub.f32 %v646, %v721
        %v904 = vsub.f32 %v647, %v721
        %v905 = vsub.f32 %v648, %v721
        %v906 = vsub.f32 %v649, %v721
        %v907 = vsub.f32 %v650, %v721
        %v908 = vsub.f32 %v651, %v721
        %v909 = vsub.f32 %v652, %v721
        %v910 = vsub.f32 %v653, %v721
        %v911 = vsub.f32 %v654, %v721
        %v912 = vsub.f32 %v655, %v721
        %v913 = vsub.f32 %v656, %v721
        %v914 = vsub.f32 %v657, %v721
        %v915 = vsub.f32 %v658, %v721
        %v916 = vsub.f32 %v659, %v721
        %v917 = vsub.f32 %v660, %v721
        %v918 = vsub.f32 %v661, %v721
        %v919 = vsub.f32 %v662, %v721
        %v920 = vsub.f32 %v663, %v721
        %v921 = vsub.f32 %v664, %v721
        %v922 = vsub.f32 %v665, %v721
        %v923 = vsub.f32 %v666, %v721
        %v924 = vsub.f32 %v667, %v721
        %v925 = vsub.f32 %v668, %v721
        %v926 = vsub.f32 %v669, %v721
        %v927 = vsub.f32 %v670, %v721
        %v928 = vsub.f32 %v671, %v721
        %v929 = vsub.f32 %v672, %v721
        %v930 = vsub.f32 %v673, %v721
        %v931 = vsub.f32 %v674, %v721
        %v932 = vsub.f32 %v675, %v721
        %v933 = vsub.f32 %v676, %v721
        %v934 = vsub.f32 %v677, %v721
        %v935 = vsub.f32 %v678, %v721
        %v936 = vsub.f32 %v679, %v721
        %v937 = vsub.f32 %v680, %v721
        %v938 = vsub.f32 %v681, %v721
        %v939 = vsub.f32 %v682, %v721
        %v940 = vsub.f32 %v683, %v721
        %v941 = vsub.f32 %v684, %v721
        %v942 = vsub.f32 %v685, %v721
        %v943 = vsub.f32 %v686, %v721
        %v944 = vsub.f32 %v687, %v721
        %v945 = vsub.f32 %v688, %v721
        %v946 = vsub.f32 %v689, %v721
        %v947 = vsub.f32 %v690, %v721
        %v948 = vsub.f32 %v691, %v721
        %v949 = vsub.f32 %v692, %v721
        %v950 = vsub.f32 %v693, %v721
        %v951 = vsub.f32 %v694, %v721
        %v952 = vsub.f32 %v695, %v721
        %v953 = vsub.f32 %v696, %v721
        %v954 = vsub.f32 %v697, %v721
        %v955 = vsub.f32 %v698, %v721
        %v956 = vsub.f32 %v699, %v721
        %v957 = vsub.f32 %v700, %v721
        %v958 = vsub.f32 %v701, %v721
        %v959 = vsub.f32 %v702, %v721
        %v960 = vsub.f32 %v703, %v721
        %v961 = vsub.f32 %v704, %v721
        %v962 = vsub.f32 %v705, %v721
        %v963 = vsub.f32 %v706, %v721
        %v964 = vsub.f32 %v707, %v721
        %v965 = vsub.f32 %v708, %v721
        %v966 = vsub.f32 %v709, %v721
        %v967 = vsub.f32 %v710, %v721
        %v968 = vsub.f32 %v711, %v721
        %v969 = vsub.f32 %v712, %v721
        %v970 = vsub.f32 %v713, %v721
        %v971 = vsub.f32 %v714, %v721
        %v972 = vsub.f32 %v715, %v721
        %v973 = vsub.f32 %v716, %v721
        %v974 = vsub.f32 %v717, %v721
        %v975 = vsub.f32 %v718, %v721
        %v976 = vsub.f32 %v719, %v721
        %v977 = vsub.f32 %v720, %v721
        %v978 = vand.u32 2147483647, %v722
        %v979 = vand.u32 2147483647, %v723
        %v980 = vand.u32 2147483647, %v724
        %v981 = vand.u32 2147483647, %v725
        %v982 = vand.u32 2147483647, %v726
        %v983 = vand.u32 2147483647, %v727
        %v984 = vand.u32 2147483647, %v728
        %v985 = vand.u32 2147483647, %v729
        %v986 = vand.u32 2147483647, %v730
        %v987 = vand.u32 2147483647, %v731
        %v988 = vand.u32 2147483647, %v732
        %v989 = vand.u32 2147483647, %v733
        %v990 = vand.u32 2147483647, %v734
        %v991 = vand.u32 2147483647, %v735
        %v992 = vand.u32 2147483647, %v736
        %v993 = vand.u32 2147483647, %v737
        %v994 = vand.u32 2147483647, %v738
        %v995 = vand.u32 2147483647, %v739
        %v996 = vand.u32 2147483647, %v740
        %v997 = vand.u32 2147483647, %v741
        %v998 = vand.u32 2147483647, %v742
        %v999 = vand.u32 2147483647, %v743
        %v1000 = vand.u32 2147483647, %v744
        %v1001 = vand.u32 2147483647, %v745
        %v1002 = vand.u32 2147483647, %v746
        %v1003 = vand.u32 2147483647, %v747
        %v1004 = vand.u32 2147483647, %v748
        %v1005 = vand.u32 2147483647, %v749
        %v1006 = vand.u32 2147483647, %v750
        %v1007 = vand.u32 2147483647, %v751
        %v1008 = vand.u32 2147483647, %v752
        %v1009 = vand.u32 2147483647, %v753
        %v1010 = vand.u32 2147483647, %v754
        %v1011 = vand.u32 2147483647, %v755
        %v1012 = vand.u32 2147483647, %v756
        %v1013 = vand.u32 2147483647, %v757
        %v1014 = vand.u32 2147483647, %v758
        %v1015 = vand.u32 2147483647, %v759
        %v1016 = vand.u32 2147483647, %v760
        %v1017 = vand.u32 2147483647, %v761
        %v1018 = vand.u32 2147483647, %v762
        %v1019 = vand.u32 2147483647, %v763
        %v1020 = vand.u32 2147483647, %v764
        %v1021 = vand.u32 2147483647, %v765
        %v1022 = vand.u32 2147483647, %v766
        %v1023 = vand.u32 2147483647, %v767
        %v1024 = vand.u32 2147483647, %v768
        %v1025 = vand.u32 2147483647, %v769
        %v1026 = vand.u32 2147483647, %v770
        %v1027 = vand.u32 2147483647, %v771
        %v1028 = vand.u32 2147483647, %v772
        %v1029 = vand.u32 2147483647, %v773
        %v1030 = vand.u32 2147483647, %v774
        %v1031 = vand.u32 2147483647, %v775
        %v1032 = vand.u32 2147483647, %v776
        %v1033 = vand.u32 2147483647, %v777
        %v1034 = vand.u32 2147483647, %v778
        %v1035 = vand.u32 2147483647, %v779
        %v1036 = vand.u32 2147483647, %v780
        %v1037 = vand.u32 2147483647, %v781
        %v1038 = vand.u32 2147483647, %v782
        %v1039 = vand.u32 2147483647, %v783
        %v1040 = vand.u32 2147483647, %v784
        %v1041 = vand.u32 2147483647, %v785
        %v1042 = vand.u32 2147483647, %v786
        %v1043 = vand.u32 2147483647, %v787
        %v1044 = vand.u32 2147483647, %v788
        %v1045 = vand.u32 2147483647, %v789
        %v1046 = vand.u32 2147483647, %v790
        %v1047 = vand.u32 2147483647, %v791
        %v1048 = vand.u32 2147483647, %v792
        %v1049 = vand.u32 2147483647, %v793
        %v1050 = vand.u32 2147483647, %v794
        %v1051 = vand.u32 2147483647, %v795
        %v1052 = vand.u32 2147483647, %v796
        %v1053 = vand.u32 2147483647, %v797
        %v1054 = vand.u32 2147483647, %v798
        %v1055 = vand.u32 2147483647, %v799
        %v1056 = vand.u32 2147483647, %v800
        %v1057 = vand.u32 2147483647, %v801
        %v1058 = vand.u32 2147483647, %v802
        %v1059 = vand.u32 2147483647, %v803
        %v1060 = vand.u32 2147483647, %v804
        %v1061 = vand.u32 2147483647, %v805
        %v1062 = vand.u32 2147483647, %v806
        %v1063 = vand.u32 2147483647, %v807
        %v1064 = vand.u32 2147483647, %v808
        %v1065 = vand.u32 2147483647, %v809
        %v1066 = vand.u32 2147483647, %v810
        %v1067 = vand.u32 2147483647, %v811
        %v1068 = vand.u32 2147483647, %v812
        %v1069 = vand.u32 2147483647, %v813
        %v1070 = vand.u32 2147483647, %v814
        %v1071 = vand.u32 2147483647, %v815
        %v1072 = vand.u32 2147483647, %v816
        %v1073 = vand.u32 2147483647, %v817
        %v1074 = vand.u32 2147483647, %v818
        %v1075 = vand.u32 2147483647, %v819
        %v1076 = vand.u32 2147483647, %v820
        %v1077 = vand.u32 2147483647, %v821
        %v1078 = vand.u32 2147483647, %v822
        %v1079 = vand.u32 2147483647, %v823
        %v1080 = vand.u32 2147483647, %v824
        %v1081 = vand.u32 2147483647, %v825
        %v1082 = vand.u32 2147483647, %v826
        %v1083 = vand.u32 2147483647, %v827
        %v1084 = vand.u32 2147483647, %v828
        %v1085 = vand.u32 2147483647, %v829
        %v1086 = vand.u32 2147483647, %v830
        %v1087 = vand.u32 2147483647, %v831
        %v1088 = vand.u32 2147483647, %v832
        %v1089 = vand.u32 2147483647, %v833
        %v1090 = vand.u32 2147483647, %v834
        %v1091 = vand.u32 2147483647, %v835
        %v1092 = vand.u32 2147483647, %v836
        %v1093 = vand.u32 2147483647, %v837
        %v1094 = vand.u32 2147483647, %v838
        %v1095 = vand.u32 2147483647, %v839
        %v1096 = vand.u32 2147483647, %v840
        %v1097 = vand.u32 2147483647, %v841
        %v1098 = vand.u32 2147483647, %v842
        %v1099 = vand.u32 2147483647, %v843
        %v1100 = vand.u32 2147483647, %v844
        %v1101 = vand.u32 2147483647, %v845
        %v1102 = vand.u32 2147483647, %v846
        %v1103 = vand.u32 2147483647, %v847
        %v1104 = vand.u32 2147483647, %v848
        %v1105 = vand.u32 2147483647, %v849
        %v1106 = vand.u32 2147483647, %v850
        %v1107 = vand.u32 2147483647, %v851
        %v1108 = vand.u32 2147483647, %v852
        %v1109 = vand.u32 2147483647, %v853
        %v1110 = vand.u32 2147483647, %v854
        %v1111 = vand.u32 2147483647, %v855
        %v1112 = vand.u32 2147483647, %v856
        %v1113 = vand.u32 2147483647, %v857
        %v1114 = vand.u32 2147483647, %v858
        %v1115 = vand.u32 2147483647, %v859
        %v1116 = vand.u32 2147483647, %v860
        %v1117 = vand.u32 2147483647, %v861
        %v1118 = vand.u32 2147483647, %v862
        %v1119 = vand.u32 2147483647, %v863
        %v1120 = vand.u32 2147483647, %v864
        %v1121 = vand.u32 2147483647, %v865
        %v1122 = vand.u32 2147483647, %v866
        %v1123 = vand.u32 2147483647, %v867
        %v1124 = vand.u32 2147483647, %v868
        %v1125 = vand.u32 2147483647, %v869
        %v1126 = vand.u32 2147483647, %v870
        %v1127 = vand.u32 2147483647, %v871
        %v1128 = vand.u32 2147483647, %v872
        %v1129 = vand.u32 2147483647, %v873
        %v1130 = vand.u32 2147483647, %v874
        %v1131 = vand.u32 2147483647, %v875
        %v1132 = vand.u32 2147483647, %v876
        %v1133 = vand.u32 2147483647, %v877
        %v1134 = vand.u32 2147483647, %v878
        %v1135 = vand.u32 2147483647, %v879
        %v1136 = vand.u32 2147483647, %v880
        %v1137 = vand.u32 2147483647, %v881
        %v1138 = vand.u32 2147483647, %v882
        %v1139 = vand.u32 2147483647, %v883
        %v1140 = vand.u32 2147483647, %v884
        %v1141 = vand.u32 2147483647, %v885
        %v1142 = vand.u32 2147483647, %v886
        %v1143 = vand.u32 2147483647, %v887
        %v1144 = vand.u32 2147483647, %v888
        %v1145 = vand.u32 2147483647, %v889
        %v1146 = vand.u32 2147483647, %v890
        %v1147 = vand.u32 2147483647, %v891
        %v1148 = vand.u32 2147483647, %v892
        %v1149 = vand.u32 2147483647, %v893
        %v1150 = vand.u32 2147483647, %v894
        %v1151 = vand.u32 2147483647, %v895
        %v1152 = vand.u32 2147483647, %v896
        %v1153 = vand.u32 2147483647, %v897
        %v1154 = vand.u32 2147483647, %v898
        %v1155 = vand.u32 2147483647, %v899
        %v1156 = vand.u32 2147483647, %v900
        %v1157 = vand.u32 2147483647, %v901
        %v1158 = vand.u32 2147483647, %v902
        %v1159 = vand.u32 2147483647, %v903
        %v1160 = vand.u32 2147483647, %v904
        %v1161 = vand.u32 2147483647, %v905
        %v1162 = vand.u32 2147483647, %v906
        %v1163 = vand.u32 2147483647, %v907
        %v1164 = vand.u32 2147483647, %v908
        %v1165 = vand.u32 2147483647, %v909
        %v1166 = vand.u32 2147483647, %v910
        %v1167 = vand.u32 2147483647, %v911
        %v1168 = vand.u32 2147483647, %v912
        %v1169 = vand.u32 2147483647, %v913
        %v1170 = vand.u32 2147483647, %v914
        %v1171 = vand.u32 2147483647, %v915
        %v1172 = vand.u32 2147483647, %v916
        %v1173 = vand.u32 2147483647, %v917
        %v1174 = vand.u32 2147483647, %v918
        %v1175 = vand.u32 2147483647, %v919
        %v1176 = vand.u32 2147483647, %v920
        %v1177 = vand.u32 2147483647, %v921
        %v1178 = vand.u32 2147483647, %v922
        %v1179 = vand.u32 2147483647, %v923
        %v1180 = vand.u32 2147483647, %v924
        %v1181 = vand.u32 2147483647, %v925
        %v1182 = vand.u32 2147483647, %v926
        %v1183 = vand.u32 2147483647, %v927
        %v1184 = vand.u32 2147483647, %v928
        %v1185 = vand.u32 2147483647, %v929
        %v1186 = vand.u32 2147483647, %v930
        %v1187 = vand.u32 2147483647, %v931
        %v1188 = vand.u32 2147483647, %v932
        %v1189 = vand.u32 2147483647, %v933
        %v1190 = vand.u32 2147483647, %v934
        %v1191 = vand.u32 2147483647, %v935
        %v1192 = vand.u32 2147483647, %v936
        %v1193 = vand.u32 2147483647, %v937
        %v1194 = vand.u32 2147483647, %v938
        %v1195 = vand.u32 2147483647, %v939
        %v1196 = vand.u32 2147483647, %v940
        %v1197 = vand.u32 2147483647, %v941
        %v1198 = vand.u32 2147483647, %v942
        %v1199 = vand.u32 2147483647, %v943
        %v1200 = vand.u32 2147483647, %v944
        %v1201 = vand.u32 2147483647, %v945
        %v1202 = vand.u32 2147483647, %v946
        %v1203 = vand.u32 2147483647, %v947
        %v1204 = vand.u32 2147483647, %v948
        %v1205 = vand.u32 2147483647, %v949
        %v1206 = vand.u32 2147483647, %v950
        %v1207 = vand.u32 2147483647, %v951
        %v1208 = vand.u32 2147483647, %v952
        %v1209 = vand.u32 2147483647, %v953
        %v1210 = vand.u32 2147483647, %v954
        %v1211 = vand.u32 2147483647, %v955
        %v1212 = vand.u32 2147483647, %v956
        %v1213 = vand.u32 2147483647, %v957
        %v1214 = vand.u32 2147483647, %v958
        %v1215 = vand.u32 2147483647, %v959
        %v1216 = vand.u32 2147483647, %v960
        %v1217 = vand.u32 2147483647, %v961
        %v1218 = vand.u32 2147483647, %v962
        %v1219 = vand.u32 2147483647, %v963
        %v1220 = vand.u32 2147483647, %v964
        %v1221 = vand.u32 2147483647, %v965
        %v1222 = vand.u32 2147483647, %v966
        %v1223 = vand.u32 2147483647, %v967
        %v1224 = vand.u32 2147483647, %v968
        %v1225 = vand.u32 2147483647, %v969
        %v1226 = vand.u32 2147483647, %v970
        %v1227 = vand.u32 2147483647, %v971
        %v1228 = vand.u32 2147483647, %v972
        %v1229 = vand.u32 2147483647, %v973
        %v1230 = vand.u32 2147483647, %v974
        %v1231 = vand.u32 2147483647, %v975
        %v1232 = vand.u32 2147483647, %v976
        %v1233 = vand.u32 2147483647, %v977
        %v1234 = vstv %s208
        %v1235 = vmul.f32 %v1234, %v978
        %v1236 = vmul.f32 %v1234, %v979
        %v1237 = vmul.f32 %v1234, %v980
        %v1238 = vmul.f32 %v1234, %v981
        %v1239 = vmul.f32 %v1234, %v982
        %v1240 = vmul.f32 %v1234, %v983
        %v1241 = vmul.f32 %v1234, %v984
        %v1242 = vmul.f32 %v1234, %v985
        %v1243 = vmul.f32 %v1234, %v986
        %v1244 = vmul.f32 %v1234, %v987
        %v1245 = vmul.f32 %v1234, %v988
        %v1246 = vmul.f32 %v1234, %v989
        %v1247 = vmul.f32 %v1234, %v990
        %v1248 = vmul.f32 %v1234, %v991
        %v1249 = vmul.f32 %v1234, %v992
        %v1250 = vmul.f32 %v1234, %v993
        %v1251 = vmul.f32 %v1234, %v994
        %v1252 = vmul.f32 %v1234, %v995
        %v1253 = vmul.f32 %v1234, %v996
        %v1254 = vmul.f32 %v1234, %v997
        %v1255 = vmul.f32 %v1234, %v998
        %v1256 = vmul.f32 %v1234, %v999
        %v1257 = vmul.f32 %v1234, %v1000
        %v1258 = vmul.f32 %v1234, %v1001
        %v1259 = vmul.f32 %v1234, %v1002
        %v1260 = vmul.f32 %v1234, %v1003
        %v1261 = vmul.f32 %v1234, %v1004
        %v1262 = vmul.f32 %v1234, %v1005
        %v1263 = vmul.f32 %v1234, %v1006
        %v1264 = vmul.f32 %v1234, %v1007
        %v1265 = vmul.f32 %v1234, %v1008
        %v1266 = vmul.f32 %v1234, %v1009
        %v1267 = vmul.f32 %v1234, %v1010
        %v1268 = vmul.f32 %v1234, %v1011
        %v1269 = vmul.f32 %v1234, %v1012
        %v1270 = vmul.f32 %v1234, %v1013
        %v1271 = vmul.f32 %v1234, %v1014
        %v1272 = vmul.f32 %v1234, %v1015
        %v1273 = vmul.f32 %v1234, %v1016
        %v1274 = vmul.f32 %v1234, %v1017
        %v1275 = vmul.f32 %v1234, %v1018
        %v1276 = vmul.f32 %v1234, %v1019
        %v1277 = vmul.f32 %v1234, %v1020
        %v1278 = vmul.f32 %v1234, %v1021
        %v1279 = vmul.f32 %v1234, %v1022
        %v1280 = vmul.f32 %v1234, %v1023
        %v1281 = vmul.f32 %v1234, %v1024
        %v1282 = vmul.f32 %v1234, %v1025
        %v1283 = vmul.f32 %v1234, %v1026
        %v1284 = vmul.f32 %v1234, %v1027
        %v1285 = vmul.f32 %v1234, %v1028
        %v1286 = vmul.f32 %v1234, %v1029
        %v1287 = vmul.f32 %v1234, %v1030
        %v1288 = vmul.f32 %v1234, %v1031
        %v1289 = vmul.f32 %v1234, %v1032
        %v1290 = vmul.f32 %v1234, %v1033
        %v1291 = vmul.f32 %v1234, %v1034
        %v1292 = vmul.f32 %v1234, %v1035
        %v1293 = vmul.f32 %v1234, %v1036
        %v1294 = vmul.f32 %v1234, %v1037
        %v1295 = vmul.f32 %v1234, %v1038
        %v1296 = vmul.f32 %v1234, %v1039
        %v1297 = vmul.f32 %v1234, %v1040
        %v1298 = vmul.f32 %v1234, %v1041
        %v1299 = vmul.f32 %v1234, %v1042
        %v1300 = vmul.f32 %v1234, %v1043
        %v1301 = vmul.f32 %v1234, %v1044
        %v1302 = vmul.f32 %v1234, %v1045
        %v1303 = vmul.f32 %v1234, %v1046
        %v1304 = vmul.f32 %v1234, %v1047
        %v1305 = vmul.f32 %v1234, %v1048
        %v1306 = vmul.f32 %v1234, %v1049
        %v1307 = vmul.f32 %v1234, %v1050
        %v1308 = vmul.f32 %v1234, %v1051
        %v1309 = vmul.f32 %v1234, %v1052
        %v1310 = vmul.f32 %v1234, %v1053
        %v1311 = vmul.f32 %v1234, %v1054
        %v1312 = vmul.f32 %v1234, %v1055
        %v1313 = vmul.f32 %v1234, %v1056
        %v1314 = vmul.f32 %v1234, %v1057
        %v1315 = vmul.f32 %v1234, %v1058
        %v1316 = vmul.f32 %v1234, %v1059
        %v1317 = vmul.f32 %v1234, %v1060
        %v1318 = vmul.f32 %v1234, %v1061
        %v1319 = vmul.f32 %v1234, %v1062
        %v1320 = vmul.f32 %v1234, %v1063
        %v1321 = vmul.f32 %v1234, %v1064
        %v1322 = vmul.f32 %v1234, %v1065
        %v1323 = vmul.f32 %v1234, %v1066
        %v1324 = vmul.f32 %v1234, %v1067
        %v1325 = vmul.f32 %v1234, %v1068
        %v1326 = vmul.f32 %v1234, %v1069
        %v1327 = vmul.f32 %v1234, %v1070
        %v1328 = vmul.f32 %v1234, %v1071
        %v1329 = vmul.f32 %v1234, %v1072
        %v1330 = vmul.f32 %v1234, %v1073
        %v1331 = vmul.f32 %v1234, %v1074
        %v1332 = vmul.f32 %v1234, %v1075
        %v1333 = vmul.f32 %v1234, %v1076
        %v1334 = vmul.f32 %v1234, %v1077
        %v1335 = vmul.f32 %v1234, %v1078
        %v1336 = vmul.f32 %v1234, %v1079
        %v1337 = vmul.f32 %v1234, %v1080
        %v1338 = vmul.f32 %v1234, %v1081
        %v1339 = vmul.f32 %v1234, %v1082
        %v1340 = vmul.f32 %v1234, %v1083
        %v1341 = vmul.f32 %v1234, %v1084
        %v1342 = vmul.f32 %v1234, %v1085
        %v1343 = vmul.f32 %v1234, %v1086
        %v1344 = vmul.f32 %v1234, %v1087
        %v1345 = vmul.f32 %v1234, %v1088
        %v1346 = vmul.f32 %v1234, %v1089
        %v1347 = vmul.f32 %v1234, %v1090
        %v1348 = vmul.f32 %v1234, %v1091
        %v1349 = vmul.f32 %v1234, %v1092
        %v1350 = vmul.f32 %v1234, %v1093
        %v1351 = vmul.f32 %v1234, %v1094
        %v1352 = vmul.f32 %v1234, %v1095
        %v1353 = vmul.f32 %v1234, %v1096
        %v1354 = vmul.f32 %v1234, %v1097
        %v1355 = vmul.f32 %v1234, %v1098
        %v1356 = vmul.f32 %v1234, %v1099
        %v1357 = vmul.f32 %v1234, %v1100
        %v1358 = vmul.f32 %v1234, %v1101
        %v1359 = vmul.f32 %v1234, %v1102
        %v1360 = vmul.f32 %v1234, %v1103
        %v1361 = vmul.f32 %v1234, %v1104
        %v1362 = vmul.f32 %v1234, %v1105
        %v1363 = vmul.f32 %v1234, %v1106
        %v1364 = vmul.f32 %v1234, %v1107
        %v1365 = vmul.f32 %v1234, %v1108
        %v1366 = vmul.f32 %v1234, %v1109
        %v1367 = vmul.f32 %v1234, %v1110
        %v1368 = vmul.f32 %v1234, %v1111
        %v1369 = vmul.f32 %v1234, %v1112
        %v1370 = vmul.f32 %v1234, %v1113
        %v1371 = vmul.f32 %v1234, %v1114
        %v1372 = vmul.f32 %v1234, %v1115
        %v1373 = vmul.f32 %v1234, %v1116
        %v1374 = vmul.f32 %v1234, %v1117
        %v1375 = vmul.f32 %v1234, %v1118
        %v1376 = vmul.f32 %v1234, %v1119
        %v1377 = vmul.f32 %v1234, %v1120
        %v1378 = vmul.f32 %v1234, %v1121
        %v1379 = vmul.f32 %v1234, %v1122
        %v1380 = vmul.f32 %v1234, %v1123
        %v1381 = vmul.f32 %v1234, %v1124
        %v1382 = vmul.f32 %v1234, %v1125
        %v1383 = vmul.f32 %v1234, %v1126
        %v1384 = vmul.f32 %v1234, %v1127
        %v1385 = vmul.f32 %v1234, %v1128
        %v1386 = vmul.f32 %v1234, %v1129
        %v1387 = vmul.f32 %v1234, %v1130
        %v1388 = vmul.f32 %v1234, %v1131
        %v1389 = vmul.f32 %v1234, %v1132
        %v1390 = vmul.f32 %v1234, %v1133
        %v1391 = vmul.f32 %v1234, %v1134
        %v1392 = vmul.f32 %v1234, %v1135
        %v1393 = vmul.f32 %v1234, %v1136
        %v1394 = vmul.f32 %v1234, %v1137
        %v1395 = vmul.f32 %v1234, %v1138
        %v1396 = vmul.f32 %v1234, %v1139
        %v1397 = vmul.f32 %v1234, %v1140
        %v1398 = vmul.f32 %v1234, %v1141
        %v1399 = vmul.f32 %v1234, %v1142
        %v1400 = vmul.f32 %v1234, %v1143
        %v1401 = vmul.f32 %v1234, %v1144
        %v1402 = vmul.f32 %v1234, %v1145
        %v1403 = vmul.f32 %v1234, %v1146
        %v1404 = vmul.f32 %v1234, %v1147
        %v1405 = vmul.f32 %v1234, %v1148
        %v1406 = vmul.f32 %v1234, %v1149
        %v1407 = vmul.f32 %v1234, %v1150
        %v1408 = vmul.f32 %v1234, %v1151
        %v1409 = vmul.f32 %v1234, %v1152
        %v1410 = vmul.f32 %v1234, %v1153
        %v1411 = vmul.f32 %v1234, %v1154
        %v1412 = vmul.f32 %v1234, %v1155
        %v1413 = vmul.f32 %v1234, %v1156
        %v1414 = vmul.f32 %v1234, %v1157
        %v1415 = vmul.f32 %v1234, %v1158
        %v1416 = vmul.f32 %v1234, %v1159
        %v1417 = vmul.f32 %v1234, %v1160
        %v1418 = vmul.f32 %v1234, %v1161
        %v1419 = vmul.f32 %v1234, %v1162
        %v1420 = vmul.f32 %v1234, %v1163
        %v1421 = vmul.f32 %v1234, %v1164
        %v1422 = vmul.f32 %v1234, %v1165
        %v1423 = vmul.f32 %v1234, %v1166
        %v1424 = vmul.f32 %v1234, %v1167
        %v1425 = vmul.f32 %v1234, %v1168
        %v1426 = vmul.f32 %v1234, %v1169
        %v1427 = vmul.f32 %v1234, %v1170
        %v1428 = vmul.f32 %v1234, %v1171
        %v1429 = vmul.f32 %v1234, %v1172
        %v1430 = vmul.f32 %v1234, %v1173
        %v1431 = vmul.f32 %v1234, %v1174
        %v1432 = vmul.f32 %v1234, %v1175
        %v1433 = vmul.f32 %v1234, %v1176
        %v1434 = vmul.f32 %v1234, %v1177
        %v1435 = vmul.f32 %v1234, %v1178
        %v1436 = vmul.f32 %v1234, %v1179
        %v1437 = vmul.f32 %v1234, %v1180
        %v1438 = vmul.f32 %v1234, %v1181
        %v1439 = vmul.f32 %v1234, %v1182
        %v1440 = vmul.f32 %v1234, %v1183
        %v1441 = vmul.f32 %v1234, %v1184
        %v1442 = vmul.f32 %v1234, %v1185
        %v1443 = vmul.f32 %v1234, %v1186
        %v1444 = vmul.f32 %v1234, %v1187
        %v1445 = vmul.f32 %v1234, %v1188
        %v1446 = vmul.f32 %v1234, %v1189
        %v1447 = vmul.f32 %v1234, %v1190
        %v1448 = vmul.f32 %v1234, %v1191
        %v1449 = vmul.f32 %v1234, %v1192
        %v1450 = vmul.f32 %v1234, %v1193
        %v1451 = vmul.f32 %v1234, %v1194
        %v1452 = vmul.f32 %v1234, %v1195
        %v1453 = vmul.f32 %v1234, %v1196
        %v1454 = vmul.f32 %v1234, %v1197
        %v1455 = vmul.f32 %v1234, %v1198
        %v1456 = vmul.f32 %v1234, %v1199
        %v1457 = vmul.f32 %v1234, %v1200
        %v1458 = vmul.f32 %v1234, %v1201
        %v1459 = vmul.f32 %v1234, %v1202
        %v1460 = vmul.f32 %v1234, %v1203
        %v1461 = vmul.f32 %v1234, %v1204
        %v1462 = vmul.f32 %v1234, %v1205
        %v1463 = vmul.f32 %v1234, %v1206
        %v1464 = vmul.f32 %v1234, %v1207
        %v1465 = vmul.f32 %v1234, %v1208
        %v1466 = vmul.f32 %v1234, %v1209
        %v1467 = vmul.f32 %v1234, %v1210
        %v1468 = vmul.f32 %v1234, %v1211
        %v1469 = vmul.f32 %v1234, %v1212
        %v1470 = vmul.f32 %v1234, %v1213
        %v1471 = vmul.f32 %v1234, %v1214
        %v1472 = vmul.f32 %v1234, %v1215
        %v1473 = vmul.f32 %v1234, %v1216
        %v1474 = vmul.f32 %v1234, %v1217
        %v1475 = vmul.f32 %v1234, %v1218
        %v1476 = vmul.f32 %v1234, %v1219
        %v1477 = vmul.f32 %v1234, %v1220
        %v1478 = vmul.f32 %v1234, %v1221
        %v1479 = vmul.f32 %v1234, %v1222
        %v1480 = vmul.f32 %v1234, %v1223
        %v1481 = vmul.f32 %v1234, %v1224
        %v1482 = vmul.f32 %v1234, %v1225
        %v1483 = vmul.f32 %v1234, %v1226
        %v1484 = vmul.f32 %v1234, %v1227
        %v1485 = vmul.f32 %v1234, %v1228
        %v1486 = vmul.f32 %v1234, %v1229
        %v1487 = vmul.f32 %v1234, %v1230
        %v1488 = vmul.f32 %v1234, %v1231
        %v1489 = vmul.f32 %v1234, %v1232
        %v1490 = vmul.f32 %v1234, %v1233
        %v1491 = vadd.f32 %v1235, 1.0
        %v1492 = vadd.f32 %v1236, 1.0
        %v1493 = vadd.f32 %v1237, 1.0
        %v1494 = vadd.f32 %v1238, 1.0
        %v1495 = vadd.f32 %v1239, 1.0
        %v1496 = vadd.f32 %v1240, 1.0
        %v1497 = vadd.f32 %v1241, 1.0
        %v1498 = vadd.f32 %v1242, 1.0
        %v1499 = vadd.f32 %v1243, 1.0
        %v1500 = vadd.f32 %v1244, 1.0
        %v1501 = vadd.f32 %v1245, 1.0
        %v1502 = vadd.f32 %v1246, 1.0
        %v1503 = vadd.f32 %v1247, 1.0
        %v1504 = vadd.f32 %v1248, 1.0
        %v1505 = vadd.f32 %v1249, 1.0
        %v1506 = vadd.f32 %v1250, 1.0
        %v1507 = vadd.f32 %v1251, 1.0
        %v1508 = vadd.f32 %v1252, 1.0
        %v1509 = vadd.f32 %v1253, 1.0
        %v1510 = vadd.f32 %v1254, 1.0
        %v1511 = vadd.f32 %v1255, 1.0
        %v1512 = vadd.f32 %v1256, 1.0
        %v1513 = vadd.f32 %v1257, 1.0
        %v1514 = vadd.f32 %v1258, 1.0
        %v1515 = vadd.f32 %v1259, 1.0
        %v1516 = vadd.f32 %v1260, 1.0
        %v1517 = vadd.f32 %v1261, 1.0
        %v1518 = vadd.f32 %v1262, 1.0
        %v1519 = vadd.f32 %v1263, 1.0
        %v1520 = vadd.f32 %v1264, 1.0
        %v1521 = vadd.f32 %v1265, 1.0
        %v1522 = vadd.f32 %v1266, 1.0
        %v1523 = vadd.f32 %v1267, 1.0
        %v1524 = vadd.f32 %v1268, 1.0
        %v1525 = vadd.f32 %v1269, 1.0
        %v1526 = vadd.f32 %v1270, 1.0
        %v1527 = vadd.f32 %v1271, 1.0
        %v1528 = vadd.f32 %v1272, 1.0
        %v1529 = vadd.f32 %v1273, 1.0
        %v1530 = vadd.f32 %v1274, 1.0
        %v1531 = vadd.f32 %v1275, 1.0
        %v1532 = vadd.f32 %v1276, 1.0
        %v1533 = vadd.f32 %v1277, 1.0
        %v1534 = vadd.f32 %v1278, 1.0
        %v1535 = vadd.f32 %v1279, 1.0
        %v1536 = vadd.f32 %v1280, 1.0
        %v1537 = vadd.f32 %v1281, 1.0
        %v1538 = vadd.f32 %v1282, 1.0
        %v1539 = vadd.f32 %v1283, 1.0
        %v1540 = vadd.f32 %v1284, 1.0
        %v1541 = vadd.f32 %v1285, 1.0
        %v1542 = vadd.f32 %v1286, 1.0
        %v1543 = vadd.f32 %v1287, 1.0
        %v1544 = vadd.f32 %v1288, 1.0
        %v1545 = vadd.f32 %v1289, 1.0
        %v1546 = vadd.f32 %v1290, 1.0
        %v1547 = vadd.f32 %v1291, 1.0
        %v1548 = vadd.f32 %v1292, 1.0
        %v1549 = vadd.f32 %v1293, 1.0
        %v1550 = vadd.f32 %v1294, 1.0
        %v1551 = vadd.f32 %v1295, 1.0
        %v1552 = vadd.f32 %v1296, 1.0
        %v1553 = vadd.f32 %v1297, 1.0
        %v1554 = vadd.f32 %v1298, 1.0
        %v1555 = vadd.f32 %v1299, 1.0
        %v1556 = vadd.f32 %v1300, 1.0
        %v1557 = vadd.f32 %v1301, 1.0
        %v1558 = vadd.f32 %v1302, 1.0
        %v1559 = vadd.f32 %v1303, 1.0
        %v1560 = vadd.f32 %v1304, 1.0
        %v1561 = vadd.f32 %v1305, 1.0
        %v1562 = vadd.f32 %v1306, 1.0
        %v1563 = vadd.f32 %v1307, 1.0
        %v1564 = vadd.f32 %v1308, 1.0
        %v1565 = vadd.f32 %v1309, 1.0
        %v1566 = vadd.f32 %v1310, 1.0
        %v1567 = vadd.f32 %v1311, 1.0
        %v1568 = vadd.f32 %v1312, 1.0
        %v1569 = vadd.f32 %v1313, 1.0
        %v1570 = vadd.f32 %v1314, 1.0
        %v1571 = vadd.f32 %v1315, 1.0
        %v1572 = vadd.f32 %v1316, 1.0
        %v1573 = vadd.f32 %v1317, 1.0
        %v1574 = vadd.f32 %v1318, 1.0
        %v1575 = vadd.f32 %v1319, 1.0
        %v1576 = vadd.f32 %v1320, 1.0
        %v1577 = vadd.f32 %v1321, 1.0
        %v1578 = vadd.f32 %v1322, 1.0
        %v1579 = vadd.f32 %v1323, 1.0
        %v1580 = vadd.f32 %v1324, 1.0
        %v1581 = vadd.f32 %v1325, 1.0
        %v1582 = vadd.f32 %v1326, 1.0
        %v1583 = vadd.f32 %v1327, 1.0
        %v1584 = vadd.f32 %v1328, 1.0
        %v1585 = vadd.f32 %v1329, 1.0
        %v1586 = vadd.f32 %v1330, 1.0
        %v1587 = vadd.f32 %v1331, 1.0
        %v1588 = vadd.f32 %v1332, 1.0
        %v1589 = vadd.f32 %v1333, 1.0
        %v1590 = vadd.f32 %v1334, 1.0
        %v1591 = vadd.f32 %v1335, 1.0
        %v1592 = vadd.f32 %v1336, 1.0
        %v1593 = vadd.f32 %v1337, 1.0
        %v1594 = vadd.f32 %v1338, 1.0
        %v1595 = vadd.f32 %v1339, 1.0
        %v1596 = vadd.f32 %v1340, 1.0
        %v1597 = vadd.f32 %v1341, 1.0
        %v1598 = vadd.f32 %v1342, 1.0
        %v1599 = vadd.f32 %v1343, 1.0
        %v1600 = vadd.f32 %v1344, 1.0
        %v1601 = vadd.f32 %v1345, 1.0
        %v1602 = vadd.f32 %v1346, 1.0
        %v1603 = vadd.f32 %v1347, 1.0
        %v1604 = vadd.f32 %v1348, 1.0
        %v1605 = vadd.f32 %v1349, 1.0
        %v1606 = vadd.f32 %v1350, 1.0
        %v1607 = vadd.f32 %v1351, 1.0
        %v1608 = vadd.f32 %v1352, 1.0
        %v1609 = vadd.f32 %v1353, 1.0
        %v1610 = vadd.f32 %v1354, 1.0
        %v1611 = vadd.f32 %v1355, 1.0
        %v1612 = vadd.f32 %v1356, 1.0
        %v1613 = vadd.f32 %v1357, 1.0
        %v1614 = vadd.f32 %v1358, 1.0
        %v1615 = vadd.f32 %v1359, 1.0
        %v1616 = vadd.f32 %v1360, 1.0
        %v1617 = vadd.f32 %v1361, 1.0
        %v1618 = vadd.f32 %v1362, 1.0
        %v1619 = vadd.f32 %v1363, 1.0
        %v1620 = vadd.f32 %v1364, 1.0
        %v1621 = vadd.f32 %v1365, 1.0
        %v1622 = vadd.f32 %v1366, 1.0
        %v1623 = vadd.f32 %v1367, 1.0
        %v1624 = vadd.f32 %v1368, 1.0
        %v1625 = vadd.f32 %v1369, 1.0
        %v1626 = vadd.f32 %v1370, 1.0
        %v1627 = vadd.f32 %v1371, 1.0
        %v1628 = vadd.f32 %v1372, 1.0
        %v1629 = vadd.f32 %v1373, 1.0
        %v1630 = vadd.f32 %v1374, 1.0
        %v1631 = vadd.f32 %v1375, 1.0
        %v1632 = vadd.f32 %v1376, 1.0
        %v1633 = vadd.f32 %v1377, 1.0
        %v1634 = vadd.f32 %v1378, 1.0
        %v1635 = vadd.f32 %v1379, 1.0
        %v1636 = vadd.f32 %v1380, 1.0
        %v1637 = vadd.f32 %v1381, 1.0
        %v1638 = vadd.f32 %v1382, 1.0
        %v1639 = vadd.f32 %v1383, 1.0
        %v1640 = vadd.f32 %v1384, 1.0
        %v1641 = vadd.f32 %v1385, 1.0
        %v1642 = vadd.f32 %v1386, 1.0
        %v1643 = vadd.f32 %v1387, 1.0
        %v1644 = vadd.f32 %v1388, 1.0
        %v1645 = vadd.f32 %v1389, 1.0
        %v1646 = vadd.f32 %v1390, 1.0
        %v1647 = vadd.f32 %v1391, 1.0
        %v1648 = vadd.f32 %v1392, 1.0
        %v1649 = vadd.f32 %v1393, 1.0
        %v1650 = vadd.f32 %v1394, 1.0
        %v1651 = vadd.f32 %v1395, 1.0
        %v1652 = vadd.f32 %v1396, 1.0
        %v1653 = vadd.f32 %v1397, 1.0
        %v1654 = vadd.f32 %v1398, 1.0
        %v1655 = vadd.f32 %v1399, 1.0
        %v1656 = vadd.f32 %v1400, 1.0
        %v1657 = vadd.f32 %v1401, 1.0
        %v1658 = vadd.f32 %v1402, 1.0
        %v1659 = vadd.f32 %v1403, 1.0
        %v1660 = vadd.f32 %v1404, 1.0
        %v1661 = vadd.f32 %v1405, 1.0
        %v1662 = vadd.f32 %v1406, 1.0
        %v1663 = vadd.f32 %v1407, 1.0
        %v1664 = vadd.f32 %v1408, 1.0
        %v1665 = vadd.f32 %v1409, 1.0
        %v1666 = vadd.f32 %v1410, 1.0
        %v1667 = vadd.f32 %v1411, 1.0
        %v1668 = vadd.f32 %v1412, 1.0
        %v1669 = vadd.f32 %v1413, 1.0
        %v1670 = vadd.f32 %v1414, 1.0
        %v1671 = vadd.f32 %v1415, 1.0
        %v1672 = vadd.f32 %v1416, 1.0
        %v1673 = vadd.f32 %v1417, 1.0
        %v1674 = vadd.f32 %v1418, 1.0
        %v1675 = vadd.f32 %v1419, 1.0
        %v1676 = vadd.f32 %v1420, 1.0
        %v1677 = vadd.f32 %v1421, 1.0
        %v1678 = vadd.f32 %v1422, 1.0
        %v1679 = vadd.f32 %v1423, 1.0
        %v1680 = vadd.f32 %v1424, 1.0
        %v1681 = vadd.f32 %v1425, 1.0
        %v1682 = vadd.f32 %v1426, 1.0
        %v1683 = vadd.f32 %v1427, 1.0
        %v1684 = vadd.f32 %v1428, 1.0
        %v1685 = vadd.f32 %v1429, 1.0
        %v1686 = vadd.f32 %v1430, 1.0
        %v1687 = vadd.f32 %v1431, 1.0
        %v1688 = vadd.f32 %v1432, 1.0
        %v1689 = vadd.f32 %v1433, 1.0
        %v1690 = vadd.f32 %v1434, 1.0
        %v1691 = vadd.f32 %v1435, 1.0
        %v1692 = vadd.f32 %v1436, 1.0
        %v1693 = vadd.f32 %v1437, 1.0
        %v1694 = vadd.f32 %v1438, 1.0
        %v1695 = vadd.f32 %v1439, 1.0
        %v1696 = vadd.f32 %v1440, 1.0
        %v1697 = vadd.f32 %v1441, 1.0
        %v1698 = vadd.f32 %v1442, 1.0
        %v1699 = vadd.f32 %v1443, 1.0
        %v1700 = vadd.f32 %v1444, 1.0
        %v1701 = vadd.f32 %v1445, 1.0
        %v1702 = vadd.f32 %v1446, 1.0
        %v1703 = vadd.f32 %v1447, 1.0
        %v1704 = vadd.f32 %v1448, 1.0
        %v1705 = vadd.f32 %v1449, 1.0
        %v1706 = vadd.f32 %v1450, 1.0
        %v1707 = vadd.f32 %v1451, 1.0
        %v1708 = vadd.f32 %v1452, 1.0
        %v1709 = vadd.f32 %v1453, 1.0
        %v1710 = vadd.f32 %v1454, 1.0
        %v1711 = vadd.f32 %v1455, 1.0
        %v1712 = vadd.f32 %v1456, 1.0
        %v1713 = vadd.f32 %v1457, 1.0
        %v1714 = vadd.f32 %v1458, 1.0
        %v1715 = vadd.f32 %v1459, 1.0
        %v1716 = vadd.f32 %v1460, 1.0
        %v1717 = vadd.f32 %v1461, 1.0
        %v1718 = vadd.f32 %v1462, 1.0
        %v1719 = vadd.f32 %v1463, 1.0
        %v1720 = vadd.f32 %v1464, 1.0
        %v1721 = vadd.f32 %v1465, 1.0
        %v1722 = vadd.f32 %v1466, 1.0
        %v1723 = vadd.f32 %v1467, 1.0
        %v1724 = vadd.f32 %v1468, 1.0
        %v1725 = vadd.f32 %v1469, 1.0
        %v1726 = vadd.f32 %v1470, 1.0
        %v1727 = vadd.f32 %v1471, 1.0
        %v1728 = vadd.f32 %v1472, 1.0
        %v1729 = vadd.f32 %v1473, 1.0
        %v1730 = vadd.f32 %v1474, 1.0
        %v1731 = vadd.f32 %v1475, 1.0
        %v1732 = vadd.f32 %v1476, 1.0
        %v1733 = vadd.f32 %v1477, 1.0
        %v1734 = vadd.f32 %v1478, 1.0
        %v1735 = vadd.f32 %v1479, 1.0
        %v1736 = vadd.f32 %v1480, 1.0
        %v1737 = vadd.f32 %v1481, 1.0
        %v1738 = vadd.f32 %v1482, 1.0
        %v1739 = vadd.f32 %v1483, 1.0
        %v1740 = vadd.f32 %v1484, 1.0
        %v1741 = vadd.f32 %v1485, 1.0
        %v1742 = vadd.f32 %v1486, 1.0
        %v1743 = vadd.f32 %v1487, 1.0
        %v1744 = vadd.f32 %v1488, 1.0
        %v1745 = vadd.f32 %v1489, 1.0
        %v1746 = vadd.f32 %v1490, 1.0
        %v1747 = vsub.f32 %v209, %v465
        %v1748 = vsub.f32 %v210, %v466
        %v1749 = vsub.f32 %v211, %v467
        %v1750 = vsub.f32 %v212, %v468
        %v1751 = vsub.f32 %v213, %v469
        %v1752 = vsub.f32 %v214, %v470
        %v1753 = vsub.f32 %v215, %v471
        %v1754 = vsub.f32 %v216, %v472
        %v1755 = vsub.f32 %v217, %v473
        %v1756 = vsub.f32 %v218, %v474
        %v1757 = vsub.f32 %v219, %v475
        %v1758 = vsub.f32 %v220, %v476
        %v1759 = vsub.f32 %v221, %v477
        %v1760 = vsub.f32 %v222, %v478
        %v1761 = vsub.f32 %v223, %v479
        %v1762 = vsub.f32 %v224, %v480
        %v1763 = vsub.f32 %v225, %v481
        %v1764 = vsub.f32 %v226, %v482
        %v1765 = vsub.f32 %v227, %v483
        %v1766 = vsub.f32 %v228, %v484
        %v1767 = vsub.f32 %v229, %v485
        %v1768 = vsub.f32 %v230, %v486
        %v1769 = vsub.f32 %v231, %v487
        %v1770 = vsub.f32 %v232, %v488
        %v1771 = vsub.f32 %v233, %v489
        %v1772 = vsub.f32 %v234, %v490
        %v1773 = vsub.f32 %v235, %v491
        %v1774 = vsub.f32 %v236, %v492
        %v1775 = vsub.f32 %v237, %v493
        %v1776 = vsub.f32 %v238, %v494
        %v1777 = vsub.f32 %v239, %v495
        %v1778 = vsub.f32 %v240, %v496
        %v1779 = vsub.f32 %v241, %v497
        %v1780 = vsub.f32 %v242, %v498
        %v1781 = vsub.f32 %v243, %v499
        %v1782 = vsub.f32 %v244, %v500
        %v1783 = vsub.f32 %v245, %v501
        %v1784 = vsub.f32 %v246, %v502
        %v1785 = vsub.f32 %v247, %v503
        %v1786 = vsub.f32 %v248, %v504
        %v1787 = vsub.f32 %v249, %v505
        %v1788 = vsub.f32 %v250, %v506
        %v1789 = vsub.f32 %v251, %v507
        %v1790 = vsub.f32 %v252, %v508
        %v1791 = vsub.f32 %v253, %v509
        %v1792 = vsub.f32 %v254, %v510
        %v1793 = vsub.f32 %v255, %v511
        %v1794 = vsub.f32 %v256, %v512
        %v1795 = vsub.f32 %v257, %v513
        %v1796 = vsub.f32 %v258, %v514
        %v1797 = vsub.f32 %v259, %v515
        %v1798 = vsub.f32 %v260, %v516
        %v1799 = vsub.f32 %v261, %v517
        %v1800 = vsub.f32 %v262, %v518
        %v1801 = vsub.f32 %v263, %v519
        %v1802 = vsub.f32 %v264, %v520
        %v1803 = vsub.f32 %v265, %v521
        %v1804 = vsub.f32 %v266, %v522
        %v1805 = vsub.f32 %v267, %v523
        %v1806 = vsub.f32 %v268, %v524
        %v1807 = vsub.f32 %v269, %v525
        %v1808 = vsub.f32 %v270, %v526
        %v1809 = vsub.f32 %v271, %v527
        %v1810 = vsub.f32 %v272, %v528
        %v1811 = vsub.f32 %v273, %v529
        %v1812 = vsub.f32 %v274, %v530
        %v1813 = vsub.f32 %v275, %v531
        %v1814 = vsub.f32 %v276, %v532
        %v1815 = vsub.f32 %v277, %v533
        %v1816 = vsub.f32 %v278, %v534
        %v1817 = vsub.f32 %v279, %v535
        %v1818 = vsub.f32 %v280, %v536
        %v1819 = vsub.f32 %v281, %v537
        %v1820 = vsub.f32 %v282, %v538
        %v1821 = vsub.f32 %v283, %v539
        %v1822 = vsub.f32 %v284, %v540
        %v1823 = vsub.f32 %v285, %v541
        %v1824 = vsub.f32 %v286, %v542
        %v1825 = vsub.f32 %v287, %v543
        %v1826 = vsub.f32 %v288, %v544
        %v1827 = vsub.f32 %v289, %v545
        %v1828 = vsub.f32 %v290, %v546
        %v1829 = vsub.f32 %v291, %v547
        %v1830 = vsub.f32 %v292, %v548
        %v1831 = vsub.f32 %v293, %v549
        %v1832 = vsub.f32 %v294, %v550
        %v1833 = vsub.f32 %v295, %v551
        %v1834 = vsub.f32 %v296, %v552
        %v1835 = vsub.f32 %v297, %v553
        %v1836 = vsub.f32 %v298, %v554
        %v1837 = vsub.f32 %v299, %v555
        %v1838 = vsub.f32 %v300, %v556
        %v1839 = vsub.f32 %v301, %v557
        %v1840 = vsub.f32 %v302, %v558
        %v1841 = vsub.f32 %v303, %v559
        %v1842 = vsub.f32 %v304, %v560
        %v1843 = vsub.f32 %v305, %v561
        %v1844 = vsub.f32 %v306, %v562
        %v1845 = vsub.f32 %v307, %v563
        %v1846 = vsub.f32 %v308, %v564
        %v1847 = vsub.f32 %v309, %v565
        %v1848 = vsub.f32 %v310, %v566
        %v1849 = vsub.f32 %v311, %v567
        %v1850 = vsub.f32 %v312, %v568
        %v1851 = vsub.f32 %v313, %v569
        %v1852 = vsub.f32 %v314, %v570
        %v1853 = vsub.f32 %v315, %v571
        %v1854 = vsub.f32 %v316, %v572
        %v1855 = vsub.f32 %v317, %v573
        %v1856 = vsub.f32 %v318, %v574
        %v1857 = vsub.f32 %v319, %v575
        %v1858 = vsub.f32 %v320, %v576
        %v1859 = vsub.f32 %v321, %v577
        %v1860 = vsub.f32 %v322, %v578
        %v1861 = vsub.f32 %v323, %v579
        %v1862 = vsub.f32 %v324, %v580
        %v1863 = vsub.f32 %v325, %v581
        %v1864 = vsub.f32 %v326, %v582
        %v1865 = vsub.f32 %v327, %v583
        %v1866 = vsub.f32 %v328, %v584
        %v1867 = vsub.f32 %v329, %v585
        %v1868 = vsub.f32 %v330, %v586
        %v1869 = vsub.f32 %v331, %v587
        %v1870 = vsub.f32 %v332, %v588
        %v1871 = vsub.f32 %v333, %v589
        %v1872 = vsub.f32 %v334, %v590
        %v1873 = vsub.f32 %v335, %v591
        %v1874 = vsub.f32 %v336, %v592
        %v1875 = vsub.f32 %v337, %v593
        %v1876 = vsub.f32 %v338, %v594
        %v1877 = vsub.f32 %v339, %v595
        %v1878 = vsub.f32 %v340, %v596
        %v1879 = vsub.f32 %v341, %v597
        %v1880 = vsub.f32 %v342, %v598
        %v1881 = vsub.f32 %v343, %v599
        %v1882 = vsub.f32 %v344, %v600
        %v1883 = vsub.f32 %v345, %v601
        %v1884 = vsub.f32 %v346, %v602
        %v1885 = vsub.f32 %v347, %v603
        %v1886 = vsub.f32 %v348, %v604
        %v1887 = vsub.f32 %v349, %v605
        %v1888 = vsub.f32 %v350, %v606
        %v1889 = vsub.f32 %v351, %v607
        %v1890 = vsub.f32 %v352, %v608
        %v1891 = vsub.f32 %v353, %v609
        %v1892 = vsub.f32 %v354, %v610
        %v1893 = vsub.f32 %v355, %v611
        %v1894 = vsub.f32 %v356, %v612
        %v1895 = vsub.f32 %v357, %v613
        %v1896 = vsub.f32 %v358, %v614
        %v1897 = vsub.f32 %v359, %v615
        %v1898 = vsub.f32 %v360, %v616
        %v1899 = vsub.f32 %v361, %v617
        %v1900 = vsub.f32 %v362, %v618
        %v1901 = vsub.f32 %v363, %v619
        %v1902 = vsub.f32 %v364, %v620
        %v1903 = vsub.f32 %v365, %v621
        %v1904 = vsub.f32 %v366, %v622
        %v1905 = vsub.f32 %v367, %v623
        %v1906 = vsub.f32 %v368, %v624
        %v1907 = vsub.f32 %v369, %v625
        %v1908 = vsub.f32 %v370, %v626
        %v1909 = vsub.f32 %v371, %v627
        %v1910 = vsub.f32 %v372, %v628
        %v1911 = vsub.f32 %v373, %v629
        %v1912 = vsub.f32 %v374, %v630
        %v1913 = vsub.f32 %v375, %v631
        %v1914 = vsub.f32 %v376, %v632
        %v1915 = vsub.f32 %v377, %v633
        %v1916 = vsub.f32 %v378, %v634
        %v1917 = vsub.f32 %v379, %v635
        %v1918 = vsub.f32 %v380, %v636
        %v1919 = vsub.f32 %v381, %v637
        %v1920 = vsub.f32 %v382, %v638
        %v1921 = vsub.f32 %v383, %v639
        %v1922 = vsub.f32 %v384, %v640
        %v1923 = vsub.f32 %v385, %v641
        %v1924 = vsub.f32 %v386, %v642
        %v1925 = vsub.f32 %v387, %v643
        %v1926 = vsub.f32 %v388, %v644
        %v1927 = vsub.f32 %v389, %v645
        %v1928 = vsub.f32 %v390, %v646
        %v1929 = vsub.f32 %v391, %v647
        %v1930 = vsub.f32 %v392, %v648
        %v1931 = vsub.f32 %v393, %v649
        %v1932 = vsub.f32 %v394, %v650
        %v1933 = vsub.f32 %v395, %v651
        %v1934 = vsub.f32 %v396, %v652
        %v1935 = vsub.f32 %v397, %v653
        %v1936 = vsub.f32 %v398, %v654
        %v1937 = vsub.f32 %v399, %v655
        %v1938 = vsub.f32 %v400, %v656
        %v1939 = vsub.f32 %v401, %v657
        %v1940 = vsub.f32 %v402, %v658
        %v1941 = vsub.f32 %v403, %v659
        %v1942 = vsub.f32 %v404, %v660
        %v1943 = vsub.f32 %v405, %v661
        %v1944 = vsub.f32 %v406, %v662
        %v1945 = vsub.f32 %v407, %v663
        %v1946 = vsub.f32 %v408, %v664
        %v1947 = vsub.f32 %v409, %v665
        %v1948 = vsub.f32 %v410, %v666
        %v1949 = vsub.f32 %v411, %v667
        %v1950 = vsub.f32 %v412, %v668
        %v1951 = vsub.f32 %v413, %v669
        %v1952 = vsub.f32 %v414, %v670
        %v1953 = vsub.f32 %v415, %v671
        %v1954 = vsub.f32 %v416, %v672
        %v1955 = vsub.f32 %v417, %v673
        %v1956 = vsub.f32 %v418, %v674
        %v1957 = vsub.f32 %v419, %v675
        %v1958 = vsub.f32 %v420, %v676
        %v1959 = vsub.f32 %v421, %v677
        %v1960 = vsub.f32 %v422, %v678
        %v1961 = vsub.f32 %v423, %v679
        %v1962 = vsub.f32 %v424, %v680
        %v1963 = vsub.f32 %v425, %v681
        %v1964 = vsub.f32 %v426, %v682
        %v1965 = vsub.f32 %v427, %v683
        %v1966 = vsub.f32 %v428, %v684
        %v1967 = vsub.f32 %v429, %v685
        %v1968 = vsub.f32 %v430, %v686
        %v1969 = vsub.f32 %v431, %v687
        %v1970 = vsub.f32 %v432, %v688
        %v1971 = vsub.f32 %v433, %v689
        %v1972 = vsub.f32 %v434, %v690
        %v1973 = vsub.f32 %v435, %v691
        %v1974 = vsub.f32 %v436, %v692
        %v1975 = vsub.f32 %v437, %v693
        %v1976 = vsub.f32 %v438, %v694
        %v1977 = vsub.f32 %v439, %v695
        %v1978 = vsub.f32 %v440, %v696
        %v1979 = vsub.f32 %v441, %v697
        %v1980 = vsub.f32 %v442, %v698
        %v1981 = vsub.f32 %v443, %v699
        %v1982 = vsub.f32 %v444, %v700
        %v1983 = vsub.f32 %v445, %v701
        %v1984 = vsub.f32 %v446, %v702
        %v1985 = vsub.f32 %v447, %v703
        %v1986 = vsub.f32 %v448, %v704
        %v1987 = vsub.f32 %v449, %v705
        %v1988 = vsub.f32 %v450, %v706
        %v1989 = vsub.f32 %v451, %v707
        %v1990 = vsub.f32 %v452, %v708
        %v1991 = vsub.f32 %v453, %v709
        %v1992 = vsub.f32 %v454, %v710
        %v1993 = vsub.f32 %v455, %v711
        %v1994 = vsub.f32 %v456, %v712
        %v1995 = vsub.f32 %v457, %v713
        %v1996 = vsub.f32 %v458, %v714
        %v1997 = vsub.f32 %v459, %v715
        %v1998 = vsub.f32 %v460, %v716
        %v1999 = vsub.f32 %v461, %v717
        %v2000 = vsub.f32 %v462, %v718
        %v2001 = vsub.f32 %v463, %v719
        %v2002 = vsub.f32 %v464, %v720
        %v2003 = vmul.f32 %v1747, %v1747
        %v2004 = vmul.f32 %v1748, %v1748
        %v2005 = vmul.f32 %v1749, %v1749
        %v2006 = vmul.f32 %v1750, %v1750
        %v2007 = vmul.f32 %v1751, %v1751
        %v2008 = vmul.f32 %v1752, %v1752
        %v2009 = vmul.f32 %v1753, %v1753
        %v2010 = vmul.f32 %v1754, %v1754
        %v2011 = vmul.f32 %v1755, %v1755
        %v2012 = vmul.f32 %v1756, %v1756
        %v2013 = vmul.f32 %v1757, %v1757
        %v2014 = vmul.f32 %v1758, %v1758
        %v2015 = vmul.f32 %v1759, %v1759
        %v2016 = vmul.f32 %v1760, %v1760
        %v2017 = vmul.f32 %v1761, %v1761
        %v2018 = vmul.f32 %v1762, %v1762
        %v2019 = vmul.f32 %v1763, %v1763
        %v2020 = vmul.f32 %v1764, %v1764
        %v2021 = vmul.f32 %v1765, %v1765
        %v2022 = vmul.f32 %v1766, %v1766
        %v2023 = vmul.f32 %v1767, %v1767
        %v2024 = vmul.f32 %v1768, %v1768
        %v2025 = vmul.f32 %v1769, %v1769
        %v2026 = vmul.f32 %v1770, %v1770
        %v2027 = vmul.f32 %v1771, %v1771
        %v2028 = vmul.f32 %v1772, %v1772
        %v2029 = vmul.f32 %v1773, %v1773
        %v2030 = vmul.f32 %v1774, %v1774
        %v2031 = vmul.f32 %v1775, %v1775
        %v2032 = vmul.f32 %v1776, %v1776
        %v2033 = vmul.f32 %v1777, %v1777
        %v2034 = vmul.f32 %v1778, %v1778
        %v2035 = vmul.f32 %v1779, %v1779
        %v2036 = vmul.f32 %v1780, %v1780
        %v2037 = vmul.f32 %v1781, %v1781
        %v2038 = vmul.f32 %v1782, %v1782
        %v2039 = vmul.f32 %v1783, %v1783
        %v2040 = vmul.f32 %v1784, %v1784
        %v2041 = vmul.f32 %v1785, %v1785
        %v2042 = vmul.f32 %v1786, %v1786
        %v2043 = vmul.f32 %v1787, %v1787
        %v2044 = vmul.f32 %v1788, %v1788
        %v2045 = vmul.f32 %v1789, %v1789
        %v2046 = vmul.f32 %v1790, %v1790
        %v2047 = vmul.f32 %v1791, %v1791
        %v2048 = vmul.f32 %v1792, %v1792
        %v2049 = vmul.f32 %v1793, %v1793
        %v2050 = vmul.f32 %v1794, %v1794
        %v2051 = vmul.f32 %v1795, %v1795
        %v2052 = vmul.f32 %v1796, %v1796
        %v2053 = vmul.f32 %v1797, %v1797
        %v2054 = vmul.f32 %v1798, %v1798
        %v2055 = vmul.f32 %v1799, %v1799
        %v2056 = vmul.f32 %v1800, %v1800
        %v2057 = vmul.f32 %v1801, %v1801
        %v2058 = vmul.f32 %v1802, %v1802
        %v2059 = vmul.f32 %v1803, %v1803
        %v2060 = vmul.f32 %v1804, %v1804
        %v2061 = vmul.f32 %v1805, %v1805
        %v2062 = vmul.f32 %v1806, %v1806
        %v2063 = vmul.f32 %v1807, %v1807
        %v2064 = vmul.f32 %v1808, %v1808
        %v2065 = vmul.f32 %v1809, %v1809
        %v2066 = vmul.f32 %v1810, %v1810
        %v2067 = vmul.f32 %v1811, %v1811
        %v2068 = vmul.f32 %v1812, %v1812
        %v2069 = vmul.f32 %v1813, %v1813
        %v2070 = vmul.f32 %v1814, %v1814
        %v2071 = vmul.f32 %v1815, %v1815
        %v2072 = vmul.f32 %v1816, %v1816
        %v2073 = vmul.f32 %v1817, %v1817
        %v2074 = vmul.f32 %v1818, %v1818
        %v2075 = vmul.f32 %v1819, %v1819
        %v2076 = vmul.f32 %v1820, %v1820
        %v2077 = vmul.f32 %v1821, %v1821
        %v2078 = vmul.f32 %v1822, %v1822
        %v2079 = vmul.f32 %v1823, %v1823
        %v2080 = vmul.f32 %v1824, %v1824
        %v2081 = vmul.f32 %v1825, %v1825
        %v2082 = vmul.f32 %v1826, %v1826
        %v2083 = vmul.f32 %v1827, %v1827
        %v2084 = vmul.f32 %v1828, %v1828
        %v2085 = vmul.f32 %v1829, %v1829
        %v2086 = vmul.f32 %v1830, %v1830
        %v2087 = vmul.f32 %v1831, %v1831
        %v2088 = vmul.f32 %v1832, %v1832
        %v2089 = vmul.f32 %v1833, %v1833
        %v2090 = vmul.f32 %v1834, %v1834
        %v2091 = vmul.f32 %v1835, %v1835
        %v2092 = vmul.f32 %v1836, %v1836
        %v2093 = vmul.f32 %v1837, %v1837
        %v2094 = vmul.f32 %v1838, %v1838
        %v2095 = vmul.f32 %v1839, %v1839
        %v2096 = vmul.f32 %v1840, %v1840
        %v2097 = vmul.f32 %v1841, %v1841
        %v2098 = vmul.f32 %v1842, %v1842
        %v2099 = vmul.f32 %v1843, %v1843
        %v2100 = vmul.f32 %v1844, %v1844
        %v2101 = vmul.f32 %v1845, %v1845
        %v2102 = vmul.f32 %v1846, %v1846
        %v2103 = vmul.f32 %v1847, %v1847
        %v2104 = vmul.f32 %v1848, %v1848
        %v2105 = vmul.f32 %v1849, %v1849
        %v2106 = vmul.f32 %v1850, %v1850
        %v2107 = vmul.f32 %v1851, %v1851
        %v2108 = vmul.f32 %v1852, %v1852
        %v2109 = vmul.f32 %v1853, %v1853
        %v2110 = vmul.f32 %v1854, %v1854
        %v2111 = vmul.f32 %v1855, %v1855
        %v2112 = vmul.f32 %v1856, %v1856
        %v2113 = vmul.f32 %v1857, %v1857
        %v2114 = vmul.f32 %v1858, %v1858
        %v2115 = vmul.f32 %v1859, %v1859
        %v2116 = vmul.f32 %v1860, %v1860
        %v2117 = vmul.f32 %v1861, %v1861
        %v2118 = vmul.f32 %v1862, %v1862
        %v2119 = vmul.f32 %v1863, %v1863
        %v2120 = vmul.f32 %v1864, %v1864
        %v2121 = vmul.f32 %v1865, %v1865
        %v2122 = vmul.f32 %v1866, %v1866
        %v2123 = vmul.f32 %v1867, %v1867
        %v2124 = vmul.f32 %v1868, %v1868
        %v2125 = vmul.f32 %v1869, %v1869
        %v2126 = vmul.f32 %v1870, %v1870
        %v2127 = vmul.f32 %v1871, %v1871
        %v2128 = vmul.f32 %v1872, %v1872
        %v2129 = vmul.f32 %v1873, %v1873
        %v2130 = vmul.f32 %v1874, %v1874
        %v2131 = vmul.f32 %v1875, %v1875
        %v2132 = vmul.f32 %v1876, %v1876
        %v2133 = vmul.f32 %v1877, %v1877
        %v2134 = vmul.f32 %v1878, %v1878
        %v2135 = vmul.f32 %v1879, %v1879
        %v2136 = vmul.f32 %v1880, %v1880
        %v2137 = vmul.f32 %v1881, %v1881
        %v2138 = vmul.f32 %v1882, %v1882
        %v2139 = vmul.f32 %v1883, %v1883
        %v2140 = vmul.f32 %v1884, %v1884
        %v2141 = vmul.f32 %v1885, %v1885
        %v2142 = vmul.f32 %v1886, %v1886
        %v2143 = vmul.f32 %v1887, %v1887
        %v2144 = vmul.f32 %v1888, %v1888
        %v2145 = vmul.f32 %v1889, %v1889
        %v2146 = vmul.f32 %v1890, %v1890
        %v2147 = vmul.f32 %v1891, %v1891
        %v2148 = vmul.f32 %v1892, %v1892
        %v2149 = vmul.f32 %v1893, %v1893
        %v2150 = vmul.f32 %v1894, %v1894
        %v2151 = vmul.f32 %v1895, %v1895
        %v2152 = vmul.f32 %v1896, %v1896
        %v2153 = vmul.f32 %v1897, %v1897
        %v2154 = vmul.f32 %v1898, %v1898
        %v2155 = vmul.f32 %v1899, %v1899
        %v2156 = vmul.f32 %v1900, %v1900
        %v2157 = vmul.f32 %v1901, %v1901
        %v2158 = vmul.f32 %v1902, %v1902
        %v2159 = vmul.f32 %v1903, %v1903
        %v2160 = vmul.f32 %v1904, %v1904
        %v2161 = vmul.f32 %v1905, %v1905
        %v2162 = vmul.f32 %v1906, %v1906
        %v2163 = vmul.f32 %v1907, %v1907
        %v2164 = vmul.f32 %v1908, %v1908
        %v2165 = vmul.f32 %v1909, %v1909
        %v2166 = vmul.f32 %v1910, %v1910
        %v2167 = vmul.f32 %v1911, %v1911
        %v2168 = vmul.f32 %v1912, %v1912
        %v2169 = vmul.f32 %v1913, %v1913
        %v2170 = vmul.f32 %v1914, %v1914
        %v2171 = vmul.f32 %v1915, %v1915
        %v2172 = vmul.f32 %v1916, %v1916
        %v2173 = vmul.f32 %v1917, %v1917
        %v2174 = vmul.f32 %v1918, %v1918
        %v2175 = vmul.f32 %v1919, %v1919
        %v2176 = vmul.f32 %v1920, %v1920
        %v2177 = vmul.f32 %v1921, %v1921
        %v2178 = vmul.f32 %v1922, %v1922
        %v2179 = vmul.f32 %v1923, %v1923
        %v2180 = vmul.f32 %v1924, %v1924
        %v2181 = vmul.f32 %v1925, %v1925
        %v2182 = vmul.f32 %v1926, %v1926
        %v2183 = vmul.f32 %v1927, %v1927
        %v2184 = vmul.f32 %v1928, %v1928
        %v2185 = vmul.f32 %v1929, %v1929
        %v2186 = vmul.f32 %v1930, %v1930
        %v2187 = vmul.f32 %v1931, %v1931
        %v2188 = vmul.f32 %v1932, %v1932
        %v2189 = vmul.f32 %v1933, %v1933
        %v2190 = vmul.f32 %v1934, %v1934
        %v2191 = vmul.f32 %v1935, %v1935
        %v2192 = vmul.f32 %v1936, %v1936
        %v2193 = vmul.f32 %v1937, %v1937
        %v2194 = vmul.f32 %v1938, %v1938
        %v2195 = vmul.f32 %v1939, %v1939
        %v2196 = vmul.f32 %v1940, %v1940
        %v2197 = vmul.f32 %v1941, %v1941
        %v2198 = vmul.f32 %v1942, %v1942
        %v2199 = vmul.f32 %v1943, %v1943
        %v2200 = vmul.f32 %v1944, %v1944
        %v2201 = vmul.f32 %v1945, %v1945
        %v2202 = vmul.f32 %v1946, %v1946
        %v2203 = vmul.f32 %v1947, %v1947
        %v2204 = vmul.f32 %v1948, %v1948
        %v2205 = vmul.f32 %v1949, %v1949
        %v2206 = vmul.f32 %v1950, %v1950
        %v2207 = vmul.f32 %v1951, %v1951
        %v2208 = vmul.f32 %v1952, %v1952
        %v2209 = vmul.f32 %v1953, %v1953
        %v2210 = vmul.f32 %v1954, %v1954
        %v2211 = vmul.f32 %v1955, %v1955
        %v2212 = vmul.f32 %v1956, %v1956
        %v2213 = vmul.f32 %v1957, %v1957
        %v2214 = vmul.f32 %v1958, %v1958
        %v2215 = vmul.f32 %v1959, %v1959
        %v2216 = vmul.f32 %v1960, %v1960
        %v2217 = vmul.f32 %v1961, %v1961
        %v2218 = vmul.f32 %v1962, %v1962
        %v2219 = vmul.f32 %v1963, %v1963
        %v2220 = vmul.f32 %v1964, %v1964
        %v2221 = vmul.f32 %v1965, %v1965
        %v2222 = vmul.f32 %v1966, %v1966
        %v2223 = vmul.f32 %v1967, %v1967
        %v2224 = vmul.f32 %v1968, %v1968
        %v2225 = vmul.f32 %v1969, %v1969
        %v2226 = vmul.f32 %v1970, %v1970
        %v2227 = vmul.f32 %v1971, %v1971
        %v2228 = vmul.f32 %v1972, %v1972
        %v2229 = vmul.f32 %v1973, %v1973
        %v2230 = vmul.f32 %v1974, %v1974
        %v2231 = vmul.f32 %v1975, %v1975
        %v2232 = vmul.f32 %v1976, %v1976
        %v2233 = vmul.f32 %v1977, %v1977
        %v2234 = vmul.f32 %v1978, %v1978
        %v2235 = vmul.f32 %v1979, %v1979
        %v2236 = vmul.f32 %v1980, %v1980
        %v2237 = vmul.f32 %v1981, %v1981
        %v2238 = vmul.f32 %v1982, %v1982
        %v2239 = vmul.f32 %v1983, %v1983
        %v2240 = vmul.f32 %v1984, %v1984
        %v2241 = vmul.f32 %v1985, %v1985
        %v2242 = vmul.f32 %v1986, %v1986
        %v2243 = vmul.f32 %v1987, %v1987
        %v2244 = vmul.f32 %v1988, %v1988
        %v2245 = vmul.f32 %v1989, %v1989
        %v2246 = vmul.f32 %v1990, %v1990
        %v2247 = vmul.f32 %v1991, %v1991
        %v2248 = vmul.f32 %v1992, %v1992
        %v2249 = vmul.f32 %v1993, %v1993
        %v2250 = vmul.f32 %v1994, %v1994
        %v2251 = vmul.f32 %v1995, %v1995
        %v2252 = vmul.f32 %v1996, %v1996
        %v2253 = vmul.f32 %v1997, %v1997
        %v2254 = vmul.f32 %v1998, %v1998
        %v2255 = vmul.f32 %v1999, %v1999
        %v2256 = vmul.f32 %v2000, %v2000
        %v2257 = vmul.f32 %v2001, %v2001
        %v2258 = vmul.f32 %v2002, %v2002
        %v2259 = vmul.f32 %v1491, %v2003
        %v2260 = vmul.f32 %v1492, %v2004
        %v2261 = vmul.f32 %v1493, %v2005
        %v2262 = vmul.f32 %v1494, %v2006
        %v2263 = vmul.f32 %v1495, %v2007
        %v2264 = vmul.f32 %v1496, %v2008
        %v2265 = vmul.f32 %v1497, %v2009
        %v2266 = vmul.f32 %v1498, %v2010
        %v2267 = vmul.f32 %v1499, %v2011
        %v2268 = vmul.f32 %v1500, %v2012
        %v2269 = vmul.f32 %v1501, %v2013
        %v2270 = vmul.f32 %v1502, %v2014
        %v2271 = vmul.f32 %v1503, %v2015
        %v2272 = vmul.f32 %v1504, %v2016
        %v2273 = vmul.f32 %v1505, %v2017
        %v2274 = vmul.f32 %v1506, %v2018
        %v2275 = vmul.f32 %v1507, %v2019
        %v2276 = vmul.f32 %v1508, %v2020
        %v2277 = vmul.f32 %v1509, %v2021
        %v2278 = vmul.f32 %v1510, %v2022
        %v2279 = vmul.f32 %v1511, %v2023
        %v2280 = vmul.f32 %v1512, %v2024
        %v2281 = vmul.f32 %v1513, %v2025
        %v2282 = vmul.f32 %v1514, %v2026
        %v2283 = vmul.f32 %v1515, %v2027
        %v2284 = vmul.f32 %v1516, %v2028
        %v2285 = vmul.f32 %v1517, %v2029
        %v2286 = vmul.f32 %v1518, %v2030
        %v2287 = vmul.f32 %v1519, %v2031
        %v2288 = vmul.f32 %v1520, %v2032
        %v2289 = vmul.f32 %v1521, %v2033
        %v2290 = vmul.f32 %v1522, %v2034
        %v2291 = vmul.f32 %v1523, %v2035
        %v2292 = vmul.f32 %v1524, %v2036
        %v2293 = vmul.f32 %v1525, %v2037
        %v2294 = vmul.f32 %v1526, %v2038
        %v2295 = vmul.f32 %v1527, %v2039
        %v2296 = vmul.f32 %v1528, %v2040
        %v2297 = vmul.f32 %v1529, %v2041
        %v2298 = vmul.f32 %v1530, %v2042
        %v2299 = vmul.f32 %v1531, %v2043
        %v2300 = vmul.f32 %v1532, %v2044
        %v2301 = vmul.f32 %v1533, %v2045
        %v2302 = vmul.f32 %v1534, %v2046
        %v2303 = vmul.f32 %v1535, %v2047
        %v2304 = vmul.f32 %v1536, %v2048
        %v2305 = vmul.f32 %v1537, %v2049
        %v2306 = vmul.f32 %v1538, %v2050
        %v2307 = vmul.f32 %v1539, %v2051
        %v2308 = vmul.f32 %v1540, %v2052
        %v2309 = vmul.f32 %v1541, %v2053
        %v2310 = vmul.f32 %v1542, %v2054
        %v2311 = vmul.f32 %v1543, %v2055
        %v2312 = vmul.f32 %v1544, %v2056
        %v2313 = vmul.f32 %v1545, %v2057
        %v2314 = vmul.f32 %v1546, %v2058
        %v2315 = vmul.f32 %v1547, %v2059
        %v2316 = vmul.f32 %v1548, %v2060
        %v2317 = vmul.f32 %v1549, %v2061
        %v2318 = vmul.f32 %v1550, %v2062
        %v2319 = vmul.f32 %v1551, %v2063
        %v2320 = vmul.f32 %v1552, %v2064
        %v2321 = vmul.f32 %v1553, %v2065
        %v2322 = vmul.f32 %v1554, %v2066
        %v2323 = vmul.f32 %v1555, %v2067
        %v2324 = vmul.f32 %v1556, %v2068
        %v2325 = vmul.f32 %v1557, %v2069
        %v2326 = vmul.f32 %v1558, %v2070
        %v2327 = vmul.f32 %v1559, %v2071
        %v2328 = vmul.f32 %v1560, %v2072
        %v2329 = vmul.f32 %v1561, %v2073
        %v2330 = vmul.f32 %v1562, %v2074
        %v2331 = vmul.f32 %v1563, %v2075
        %v2332 = vmul.f32 %v1564, %v2076
        %v2333 = vmul.f32 %v1565, %v2077
        %v2334 = vmul.f32 %v1566, %v2078
        %v2335 = vmul.f32 %v1567, %v2079
        %v2336 = vmul.f32 %v1568, %v2080
        %v2337 = vmul.f32 %v1569, %v2081
        %v2338 = vmul.f32 %v1570, %v2082
        %v2339 = vmul.f32 %v1571, %v2083
        %v2340 = vmul.f32 %v1572, %v2084
        %v2341 = vmul.f32 %v1573, %v2085
        %v2342 = vmul.f32 %v1574, %v2086
        %v2343 = vmul.f32 %v1575, %v2087
        %v2344 = vmul.f32 %v1576, %v2088
        %v2345 = vmul.f32 %v1577, %v2089
        %v2346 = vmul.f32 %v1578, %v2090
        %v2347 = vmul.f32 %v1579, %v2091
        %v2348 = vmul.f32 %v1580, %v2092
        %v2349 = vmul.f32 %v1581, %v2093
        %v2350 = vmul.f32 %v1582, %v2094
        %v2351 = vmul.f32 %v1583, %v2095
        %v2352 = vmul.f32 %v1584, %v2096
        %v2353 = vmul.f32 %v1585, %v2097
        %v2354 = vmul.f32 %v1586, %v2098
        %v2355 = vmul.f32 %v1587, %v2099
        %v2356 = vmul.f32 %v1588, %v2100
        %v2357 = vmul.f32 %v1589, %v2101
        %v2358 = vmul.f32 %v1590, %v2102
        %v2359 = vmul.f32 %v1591, %v2103
        %v2360 = vmul.f32 %v1592, %v2104
        %v2361 = vmul.f32 %v1593, %v2105
        %v2362 = vmul.f32 %v1594, %v2106
        %v2363 = vmul.f32 %v1595, %v2107
        %v2364 = vmul.f32 %v1596, %v2108
        %v2365 = vmul.f32 %v1597, %v2109
        %v2366 = vmul.f32 %v1598, %v2110
        %v2367 = vmul.f32 %v1599, %v2111
        %v2368 = vmul.f32 %v1600, %v2112
        %v2369 = vmul.f32 %v1601, %v2113
        %v2370 = vmul.f32 %v1602, %v2114
        %v2371 = vmul.f32 %v1603, %v2115
        %v2372 = vmul.f32 %v1604, %v2116
        %v2373 = vmul.f32 %v1605, %v2117
        %v2374 = vmul.f32 %v1606, %v2118
        %v2375 = vmul.f32 %v1607, %v2119
        %v2376 = vmul.f32 %v1608, %v2120
        %v2377 = vmul.f32 %v1609, %v2121
        %v2378 = vmul.f32 %v1610, %v2122
        %v2379 = vmul.f32 %v1611, %v2123
        %v2380 = vmul.f32 %v1612, %v2124
        %v2381 = vmul.f32 %v1613, %v2125
        %v2382 = vmul.f32 %v1614, %v2126
        %v2383 = vmul.f32 %v1615, %v2127
        %v2384 = vmul.f32 %v1616, %v2128
        %v2385 = vmul.f32 %v1617, %v2129
        %v2386 = vmul.f32 %v1618, %v2130
        %v2387 = vmul.f32 %v1619, %v2131
        %v2388 = vmul.f32 %v1620, %v2132
        %v2389 = vmul.f32 %v1621, %v2133
        %v2390 = vmul.f32 %v1622, %v2134
        %v2391 = vmul.f32 %v1623, %v2135
        %v2392 = vmul.f32 %v1624, %v2136
        %v2393 = vmul.f32 %v1625, %v2137
        %v2394 = vmul.f32 %v1626, %v2138
        %v2395 = vmul.f32 %v1627, %v2139
        %v2396 = vmul.f32 %v1628, %v2140
        %v2397 = vmul.f32 %v1629, %v2141
        %v2398 = vmul.f32 %v1630, %v2142
        %v2399 = vmul.f32 %v1631, %v2143
        %v2400 = vmul.f32 %v1632, %v2144
        %v2401 = vmul.f32 %v1633, %v2145
        %v2402 = vmul.f32 %v1634, %v2146
        %v2403 = vmul.f32 %v1635, %v2147
        %v2404 = vmul.f32 %v1636, %v2148
        %v2405 = vmul.f32 %v1637, %v2149
        %v2406 = vmul.f32 %v1638, %v2150
        %v2407 = vmul.f32 %v1639, %v2151
        %v2408 = vmul.f32 %v1640, %v2152
        %v2409 = vmul.f32 %v1641, %v2153
        %v2410 = vmul.f32 %v1642, %v2154
        %v2411 = vmul.f32 %v1643, %v2155
        %v2412 = vmul.f32 %v1644, %v2156
        %v2413 = vmul.f32 %v1645, %v2157
        %v2414 = vmul.f32 %v1646, %v2158
        %v2415 = vmul.f32 %v1647, %v2159
        %v2416 = vmul.f32 %v1648, %v2160
        %v2417 = vmul.f32 %v1649, %v2161
        %v2418 = vmul.f32 %v1650, %v2162
        %v2419 = vmul.f32 %v1651, %v2163
        %v2420 = vmul.f32 %v1652, %v2164
        %v2421 = vmul.f32 %v1653, %v2165
        %v2422 = vmul.f32 %v1654, %v2166
        %v2423 = vmul.f32 %v1655, %v2167
        %v2424 = vmul.f32 %v1656, %v2168
        %v2425 = vmul.f32 %v1657, %v2169
        %v2426 = vmul.f32 %v1658, %v2170
        %v2427 = vmul.f32 %v1659, %v2171
        %v2428 = vmul.f32 %v1660, %v2172
        %v2429 = vmul.f32 %v1661, %v2173
        %v2430 = vmul.f32 %v1662, %v2174
        %v2431 = vmul.f32 %v1663, %v2175
        %v2432 = vmul.f32 %v1664, %v2176
        %v2433 = vmul.f32 %v1665, %v2177
        %v2434 = vmul.f32 %v1666, %v2178
        %v2435 = vmul.f32 %v1667, %v2179
        %v2436 = vmul.f32 %v1668, %v2180
        %v2437 = vmul.f32 %v1669, %v2181
        %v2438 = vmul.f32 %v1670, %v2182
        %v2439 = vmul.f32 %v1671, %v2183
        %v2440 = vmul.f32 %v1672, %v2184
        %v2441 = vmul.f32 %v1673, %v2185
        %v2442 = vmul.f32 %v1674, %v2186
        %v2443 = vmul.f32 %v1675, %v2187
        %v2444 = vmul.f32 %v1676, %v2188
        %v2445 = vmul.f32 %v1677, %v2189
        %v2446 = vmul.f32 %v1678, %v2190
        %v2447 = vmul.f32 %v1679, %v2191
        %v2448 = vmul.f32 %v1680, %v2192
        %v2449 = vmul.f32 %v1681, %v2193
        %v2450 = vmul.f32 %v1682, %v2194
        %v2451 = vmul.f32 %v1683, %v2195
        %v2452 = vmul.f32 %v1684, %v2196
        %v2453 = vmul.f32 %v1685, %v2197
        %v2454 = vmul.f32 %v1686, %v2198
        %v2455 = vmul.f32 %v1687, %v2199
        %v2456 = vmul.f32 %v1688, %v2200
        %v2457 = vmul.f32 %v1689, %v2201
        %v2458 = vmul.f32 %v1690, %v2202
        %v2459 = vmul.f32 %v1691, %v2203
        %v2460 = vmul.f32 %v1692, %v2204
        %v2461 = vmul.f32 %v1693, %v2205
        %v2462 = vmul.f32 %v1694, %v2206
        %v2463 = vmul.f32 %v1695, %v2207
        %v2464 = vmul.f32 %v1696, %v2208
        %v2465 = vmul.f32 %v1697, %v2209
        %v2466 = vmul.f32 %v1698, %v2210
        %v2467 = vmul.f32 %v1699, %v2211
        %v2468 = vmul.f32 %v1700, %v2212
        %v2469 = vmul.f32 %v1701, %v2213
        %v2470 = vmul.f32 %v1702, %v2214
        %v2471 = vmul.f32 %v1703, %v2215
        %v2472 = vmul.f32 %v1704, %v2216
        %v2473 = vmul.f32 %v1705, %v2217
        %v2474 = vmul.f32 %v1706, %v2218
        %v2475 = vmul.f32 %v1707, %v2219
        %v2476 = vmul.f32 %v1708, %v2220
        %v2477 = vmul.f32 %v1709, %v2221
        %v2478 = vmul.f32 %v1710, %v2222
        %v2479 = vmul.f32 %v1711, %v2223
        %v2480 = vmul.f32 %v1712, %v2224
        %v2481 = vmul.f32 %v1713, %v2225
        %v2482 = vmul.f32 %v1714, %v2226
        %v2483 = vmul.f32 %v1715, %v2227
        %v2484 = vmul.f32 %v1716, %v2228
        %v2485 = vmul.f32 %v1717, %v2229
        %v2486 = vmul.f32 %v1718, %v2230
        %v2487 = vmul.f32 %v1719, %v2231
        %v2488 = vmul.f32 %v1720, %v2232
        %v2489 = vmul.f32 %v1721, %v2233
        %v2490 = vmul.f32 %v1722, %v2234
        %v2491 = vmul.f32 %v1723, %v2235
        %v2492 = vmul.f32 %v1724, %v2236
        %v2493 = vmul.f32 %v1725, %v2237
        %v2494 = vmul.f32 %v1726, %v2238
        %v2495 = vmul.f32 %v1727, %v2239
        %v2496 = vmul.f32 %v1728, %v2240
        %v2497 = vmul.f32 %v1729, %v2241
        %v2498 = vmul.f32 %v1730, %v2242
        %v2499 = vmul.f32 %v1731, %v2243
        %v2500 = vmul.f32 %v1732, %v2244
        %v2501 = vmul.f32 %v1733, %v2245
        %v2502 = vmul.f32 %v1734, %v2246
        %v2503 = vmul.f32 %v1735, %v2247
        %v2504 = vmul.f32 %v1736, %v2248
        %v2505 = vmul.f32 %v1737, %v2249
        %v2506 = vmul.f32 %v1738, %v2250
        %v2507 = vmul.f32 %v1739, %v2251
        %v2508 = vmul.f32 %v1740, %v2252
        %v2509 = vmul.f32 %v1741, %v2253
        %v2510 = vmul.f32 %v1742, %v2254
        %v2511 = vmul.f32 %v1743, %v2255
        %v2512 = vmul.f32 %v1744, %v2256
        %v2513 = vmul.f32 %v1745, %v2257
        %v2514 = vmul.f32 %v1746, %v2258
        %v2515 = vld [vmem:[#allocation2] sm:$0xff]
        %v2516 = vld [vmem:[#allocation2 + $0x8] sm:$0xff]
        %v2517 = vld [vmem:[#allocation2 + $0x10] sm:$0xff]
        %v2518 = vld [vmem:[#allocation2 + $0x18] sm:$0xff]
        %v2519 = vadd.f32 %v2259, %v2263
        %v2520 = vadd.f32 %v2519, %v2267
        %v2521 = vadd.f32 %v2520, %v2271
        %v2522 = vadd.f32 %v2521, %v2275
        %v2523 = vadd.f32 %v2522, %v2279
        %v2524 = vadd.f32 %v2523, %v2283
        %v2525 = vadd.f32 %v2524, %v2287
        %v2526 = vadd.f32 %v2525, %v2291
        %v2527 = vadd.f32 %v2526, %v2295
        %v2528 = vadd.f32 %v2527, %v2299
        %v2529 = vadd.f32 %v2528, %v2303
        %v2530 = vadd.f32 %v2529, %v2307
        %v2531 = vadd.f32 %v2530, %v2311
        %v2532 = vadd.f32 %v2531, %v2315
        %v2533 = vadd.f32 %v2532, %v2319
        %v2534 = vadd.f32 %v2533, %v2323
        %v2535 = vadd.f32 %v2534, %v2327
        %v2536 = vadd.f32 %v2535, %v2331
        %v2537 = vadd.f32 %v2536, %v2335
        %v2538 = vadd.f32 %v2537, %v2339
        %v2539 = vadd.f32 %v2538, %v2343
        %v2540 = vadd.f32 %v2539, %v2347
        %v2541 = vadd.f32 %v2540, %v2351
        %v2542 = vadd.f32 %v2541, %v2355
        %v2543 = vadd.f32 %v2542, %v2359
        %v2544 = vadd.f32 %v2543, %v2363
        %v2545 = vadd.f32 %v2544, %v2367
        %v2546 = vadd.f32 %v2545, %v2371
        %v2547 = vadd.f32 %v2546, %v2375
        %v2548 = vadd.f32 %v2547, %v2379
        %v2549 = vadd.f32 %v2548, %v2383
        %v2550 = vadd.f32 %v2549, %v2387
        %v2551 = vadd.f32 %v2550, %v2391
        %v2552 = vadd.f32 %v2551, %v2395
        %v2553 = vadd.f32 %v2552, %v2399
        %v2554 = vadd.f32 %v2553, %v2403
        %v2555 = vadd.f32 %v2554, %v2407
        %v2556 = vadd.f32 %v2555, %v2411
        %v2557 = vadd.f32 %v2556, %v2415
        %v2558 = vadd.f32 %v2557, %v2419
        %v2559 = vadd.f32 %v2558, %v2423
        %v2560 = vadd.f32 %v2559, %v2427
        %v2561 = vadd.f32 %v2560, %v2431
        %v2562 = vadd.f32 %v2561, %v2435
        %v2563 = vadd.f32 %v2562, %v2439
        %v2564 = vadd.f32 %v2563, %v2443
        %v2565 = vadd.f32 %v2564, %v2447
        %v2566 = vadd.f32 %v2565, %v2451
        %v2567 = vadd.f32 %v2566, %v2455
        %v2568 = vadd.f32 %v2567, %v2459
        %v2569 = vadd.f32 %v2568, %v2463
        %v2570 = vadd.f32 %v2569, %v2467
        %v2571 = vadd.f32 %v2570, %v2471
        %v2572 = vadd.f32 %v2571, %v2475
        %v2573 = vadd.f32 %v2572, %v2479
        %v2574 = vadd.f32 %v2573, %v2483
        %v2575 = vadd.f32 %v2574, %v2487
        %v2576 = vadd.f32 %v2575, %v2491
        %v2577 = vadd.f32 %v2576, %v2495
        %v2578 = vadd.f32 %v2577, %v2499
        %v2579 = vadd.f32 %v2578, %v2503
        %v2580 = vadd.f32 %v2579, %v2507
        %v2581 = vadd.f32 %v2580, %v2511
        %v2582 = vadd.f32 %v2260, %v2264
        %v2583 = vadd.f32 %v2582, %v2268
        %v2584 = vadd.f32 %v2583, %v2272
        %v2585 = vadd.f32 %v2584, %v2276
        %v2586 = vadd.f32 %v2585, %v2280
        %v2587 = vadd.f32 %v2586, %v2284
        %v2588 = vadd.f32 %v2587, %v2288
        %v2589 = vadd.f32 %v2588, %v2292
        %v2590 = vadd.f32 %v2589, %v2296
        %v2591 = vadd.f32 %v2590, %v2300
        %v2592 = vadd.f32 %v2591, %v2304
        %v2593 = vadd.f32 %v2592, %v2308
        %v2594 = vadd.f32 %v2593, %v2312
        %v2595 = vadd.f32 %v2594, %v2316
        %v2596 = vadd.f32 %v2595, %v2320
        %v2597 = vadd.f32 %v2596, %v2324
        %v2598 = vadd.f32 %v2597, %v2328
        %v2599 = vadd.f32 %v2598, %v2332
        %v2600 = vadd.f32 %v2599, %v2336
        %v2601 = vadd.f32 %v2600, %v2340
        %v2602 = vadd.f32 %v2601, %v2344
        %v2603 = vadd.f32 %v2602, %v2348
        %v2604 = vadd.f32 %v2603, %v2352
        %v2605 = vadd.f32 %v2604, %v2356
        %v2606 = vadd.f32 %v2605, %v2360
        %v2607 = vadd.f32 %v2606, %v2364
        %v2608 = vadd.f32 %v2607, %v2368
        %v2609 = vadd.f32 %v2608, %v2372
        %v2610 = vadd.f32 %v2609, %v2376
        %v2611 = vadd.f32 %v2610, %v2380
        %v2612 = vadd.f32 %v2611, %v2384
        %v2613 = vadd.f32 %v2612, %v2388
        %v2614 = vadd.f32 %v2613, %v2392
        %v2615 = vadd.f32 %v2614, %v2396
        %v2616 = vadd.f32 %v2615, %v2400
        %v2617 = vadd.f32 %v2616, %v2404
        %v2618 = vadd.f32 %v2617, %v2408
        %v2619 = vadd.f32 %v2618, %v2412
        %v2620 = vadd.f32 %v2619, %v2416
        %v2621 = vadd.f32 %v2620, %v2420
        %v2622 = vadd.f32 %v2621, %v2424
        %v2623 = vadd.f32 %v2622, %v2428
        %v2624 = vadd.f32 %v2623, %v2432
        %v2625 = vadd.f32 %v2624, %v2436
        %v2626 = vadd.f32 %v2625, %v2440
        %v2627 = vadd.f32 %v2626, %v2444
        %v2628 = vadd.f32 %v2627, %v2448
        %v2629 = vadd.f32 %v2628, %v2452
        %v2630 = vadd.f32 %v2629, %v2456
        %v2631 = vadd.f32 %v2630, %v2460
        %v2632 = vadd.f32 %v2631, %v2464
        %v2633 = vadd.f32 %v2632, %v2468
        %v2634 = vadd.f32 %v2633, %v2472
        %v2635 = vadd.f32 %v2634, %v2476
        %v2636 = vadd.f32 %v2635, %v2480
        %v2637 = vadd.f32 %v2636, %v2484
        %v2638 = vadd.f32 %v2637, %v2488
        %v2639 = vadd.f32 %v2638, %v2492
        %v2640 = vadd.f32 %v2639, %v2496
        %v2641 = vadd.f32 %v2640, %v2500
        %v2642 = vadd.f32 %v2641, %v2504
        %v2643 = vadd.f32 %v2642, %v2508
        %v2644 = vadd.f32 %v2643, %v2512
        %v2645 = vadd.f32 %v2261, %v2265
        %v2646 = vadd.f32 %v2645, %v2269
        %v2647 = vadd.f32 %v2646, %v2273
        %v2648 = vadd.f32 %v2647, %v2277
        %v2649 = vadd.f32 %v2648, %v2281
        %v2650 = vadd.f32 %v2649, %v2285
        %v2651 = vadd.f32 %v2650, %v2289
        %v2652 = vadd.f32 %v2651, %v2293
        %v2653 = vadd.f32 %v2652, %v2297
        %v2654 = vadd.f32 %v2653, %v2301
        %v2655 = vadd.f32 %v2654, %v2305
        %v2656 = vadd.f32 %v2655, %v2309
        %v2657 = vadd.f32 %v2656, %v2313
        %v2658 = vadd.f32 %v2657, %v2317
        %v2659 = vadd.f32 %v2658, %v2321
        %v2660 = vadd.f32 %v2659, %v2325
        %v2661 = vadd.f32 %v2660, %v2329
        %v2662 = vadd.f32 %v2661, %v2333
        %v2663 = vadd.f32 %v2662, %v2337
        %v2664 = vadd.f32 %v2663, %v2341
        %v2665 = vadd.f32 %v2664, %v2345
        %v2666 = vadd.f32 %v2665, %v2349
        %v2667 = vadd.f32 %v2666, %v2353
        %v2668 = vadd.f32 %v2667, %v2357
        %v2669 = vadd.f32 %v2668, %v2361
        %v2670 = vadd.f32 %v2669, %v2365
        %v2671 = vadd.f32 %v2670, %v2369
        %v2672 = vadd.f32 %v2671, %v2373
        %v2673 = vadd.f32 %v2672, %v2377
        %v2674 = vadd.f32 %v2673, %v2381
        %v2675 = vadd.f32 %v2674, %v2385
        %v2676 = vadd.f32 %v2675, %v2389
        %v2677 = vadd.f32 %v2676, %v2393
        %v2678 = vadd.f32 %v2677, %v2397
        %v2679 = vadd.f32 %v2678, %v2401
        %v2680 = vadd.f32 %v2679, %v2405
        %v2681 = vadd.f32 %v2680, %v2409
        %v2682 = vadd.f32 %v2681, %v2413
        %v2683 = vadd.f32 %v2682, %v2417
        %v2684 = vadd.f32 %v2683, %v2421
        %v2685 = vadd.f32 %v2684, %v2425
        %v2686 = vadd.f32 %v2685, %v2429
        %v2687 = vadd.f32 %v2686, %v2433
        %v2688 = vadd.f32 %v2687, %v2437
        %v2689 = vadd.f32 %v2688, %v2441
        %v2690 = vadd.f32 %v2689, %v2445
        %v2691 = vadd.f32 %v2690, %v2449
        %v2692 = vadd.f32 %v2691, %v2453
        %v2693 = vadd.f32 %v2692, %v2457
        %v2694 = vadd.f32 %v2693, %v2461
        %v2695 = vadd.f32 %v2694, %v2465
        %v2696 = vadd.f32 %v2695, %v2469
        %v2697 = vadd.f32 %v2696, %v2473
        %v2698 = vadd.f32 %v2697, %v2477
        %v2699 = vadd.f32 %v2698, %v2481
        %v2700 = vadd.f32 %v2699, %v2485
        %v2701 = vadd.f32 %v2700, %v2489
        %v2702 = vadd.f32 %v2701, %v2493
        %v2703 = vadd.f32 %v2702, %v2497
        %v2704 = vadd.f32 %v2703, %v2501
        %v2705 = vadd.f32 %v2704, %v2505
        %v2706 = vadd.f32 %v2705, %v2509
        %v2707 = vadd.f32 %v2706, %v2513
        %v2708 = vadd.f32 %v2262, %v2266
        %v2709 = vadd.f32 %v2708, %v2270
        %v2710 = vadd.f32 %v2709, %v2274
        %v2711 = vadd.f32 %v2710, %v2278
        %v2712 = vadd.f32 %v2711, %v2282
        %v2713 = vadd.f32 %v2712, %v2286
        %v2714 = vadd.f32 %v2713, %v2290
        %v2715 = vadd.f32 %v2714, %v2294
        %v2716 = vadd.f32 %v2715, %v2298
        %v2717 = vadd.f32 %v2716, %v2302
        %v2718 = vadd.f32 %v2717, %v2306
        %v2719 = vadd.f32 %v2718, %v2310
        %v2720 = vadd.f32 %v2719, %v2314
        %v2721 = vadd.f32 %v2720, %v2318
        %v2722 = vadd.f32 %v2721, %v2322
        %v2723 = vadd.f32 %v2722, %v2326
        %v2724 = vadd.f32 %v2723, %v2330
        %v2725 = vadd.f32 %v2724, %v2334
        %v2726 = vadd.f32 %v2725, %v2338
        %v2727 = vadd.f32 %v2726, %v2342
        %v2728 = vadd.f32 %v2727, %v2346
        %v2729 = vadd.f32 %v2728, %v2350
        %v2730 = vadd.f32 %v2729, %v2354
        %v2731 = vadd.f32 %v2730, %v2358
        %v2732 = vadd.f32 %v2731, %v2362
        %v2733 = vadd.f32 %v2732, %v2366
        %v2734 = vadd.f32 %v2733, %v2370
        %v2735 = vadd.f32 %v2734, %v2374
        %v2736 = vadd.f32 %v2735, %v2378
        %v2737 = vadd.f32 %v2736, %v2382
        %v2738 = vadd.f32 %v2737, %v2386
        %v2739 = vadd.f32 %v2738, %v2390
        %v2740 = vadd.f32 %v2739, %v2394
        %v2741 = vadd.f32 %v2740, %v2398
        %v2742 = vadd.f32 %v2741, %v2402
        %v2743 = vadd.f32 %v2742, %v2406
        %v2744 = vadd.f32 %v2743, %v2410
        %v2745 = vadd.f32 %v2744, %v2414
        %v2746 = vadd.f32 %v2745, %v2418
        %v2747 = vadd.f32 %v2746, %v2422
        %v2748 = vadd.f32 %v2747, %v2426
        %v2749 = vadd.f32 %v2748, %v2430
        %v2750 = vadd.f32 %v2749, %v2434
        %v2751 = vadd.f32 %v2750, %v2438
        %v2752 = vadd.f32 %v2751, %v2442
        %v2753 = vadd.f32 %v2752, %v2446
        %v2754 = vadd.f32 %v2753, %v2450
        %v2755 = vadd.f32 %v2754, %v2454
        %v2756 = vadd.f32 %v2755, %v2458
        %v2757 = vadd.f32 %v2756, %v2462
        %v2758 = vadd.f32 %v2757, %v2466
        %v2759 = vadd.f32 %v2758, %v2470
        %v2760 = vadd.f32 %v2759, %v2474
        %v2761 = vadd.f32 %v2760, %v2478
        %v2762 = vadd.f32 %v2761, %v2482
        %v2763 = vadd.f32 %v2762, %v2486
        %v2764 = vadd.f32 %v2763, %v2490
        %v2765 = vadd.f32 %v2764, %v2494
        %v2766 = vadd.f32 %v2765, %v2498
        %v2767 = vadd.f32 %v2766, %v2502
        %v2768 = vadd.f32 %v2767, %v2506
        %v2769 = vadd.f32 %v2768, %v2510
        %v2770 = vadd.f32 %v2769, %v2514
        %v2771 = vadd.f32 %v2515, %v2581
        %v2772 = vadd.f32 %v2516, %v2644
        %v2773 = vadd.f32 %v2517, %v2707
        %v2774 = vadd.f32 %v2518, %v2770
        %2775 = vst [vmem:[#allocation2] sm:$0xff] %v2771
        %2776 = vst [vmem:[#allocation2 + $0x8] sm:$0xff] %v2772
        %2777 = vst [vmem:[#allocation2 + $0x10] sm:$0xff] %v2773
        %2778 = vst [vmem:[#allocation2 + $0x18] sm:$0xff] %v2774
        %p2779 = scmp.eq.s32.totalorder %s25, 1
        // Predicated region
        $region41: #{tpu_custom_call.1} parent=27 // pred_check
          %p2780 = pneg %p2779
        $region42: #{tpu_custom_call.1} parent=27 // pred_check_branch
          %2782 = sbr.rel (%p2780) target = $region44
        $region43: #{tpu_custom_call.1} parent=27 // pred_region
          %v2783 = vld [vmem:[#allocation2] sm:$0xff]
          %v2784 = vld [vmem:[#allocation2 + $0x8] sm:$0xff]
          %v2785 = vld [vmem:[#allocation2 + $0x10] sm:$0xff]
          %v2786 = vld [vmem:[#allocation2 + $0x18] sm:$0xff]
          %v2787 = vadd.f32 %v2783, %v2784
          %v2788 = vadd.f32 %v2787, %v2785
          %v2789 = vadd.f32 %v2788, %v2786
          %2790 = vadd.xlane.f32.xlu0 %v2789
          %v2791 = vpop.xlane.xlu0 %2790
          %v2792 = vrot.slane %v2791, 4
          %v2793 = vadd.f32 %v2791, %v2792
          %v2794 = vrot.slane %v2793, 2
          %v2795 = vadd.f32 %v2793, %v2794
          %v2796 = vrot.slane %v2795, 1
          %v2797 = vadd.f32 %v2795, %v2796
          %s2798 = vtos %v2797
          %s2799 = scalar_lea.smem [#allocation10], 0
          %2800 = sst [smem:[%s2799]] %s2798
        $region44: #{tpu_custom_call.1} parent=27 // pred_fallthru
          _
        // Predicated region
        $region45: #{tpu_custom_call.1} parent=27 // pred_check
          %p2801 = pneg %p90
        $region46: #{tpu_custom_call.1} parent=27 // pred_check_branch
          %2803 = sbr.rel (%p2801) target = $region48
        $region47: #{tpu_custom_call.1} parent=27 // pred_region
          %s2805 = ssub.s32 16, 16
          %2806 = vsyncadd [#allocation7], %s2805
          %2809 = dma.smem_to_hbm [#allocation10], 16, %s3, [#allocation7]
        $region48: #{tpu_custom_call.1} parent=27 // pred_fallthru
          _
        // Predicated region
        $region49: #{tpu_custom_call.1} parent=27 // pred_check
          %p2810 = pneg %p90
        $region50: #{tpu_custom_call.1} parent=27 // pred_check_branch
          %2812 = sbr.rel (%p2810) target = $region52
        $region51: #{tpu_custom_call.1} parent=27 // pred_region
          %2813 = dma.done [#allocation7], 16
        $region52: #{tpu_custom_call.1} parent=27 // pred_fallthru
          _
        %2814 = sfence
      $region28: #{tpu_custom_call.1} parent=5 // pred_fallthru
        _
      %p2815 = scmp.le.s32.totalorder 2, %s20
      // Predicated region
      $region53: #{tpu_custom_call.1} parent=5 // pred_check
        %p2816 = pneg %p2815
      $region54: #{tpu_custom_call.1} parent=5 // pred_check_branch
        %2818 = sbr.rel (%p2816) target = $region56
      $region55: #{tpu_custom_call.1} parent=5 // pred_region
        %s2819 = ssub.s32 %s20, 2
      $region56: #{tpu_custom_call.1} parent=5 // pred_fallthru
        _
    $region6: #{tpu_custom_call.1} parent=1 // loop_footer
      %s24 = sadd.s32 1, %s20
    $region7: #{tpu_custom_call.1} parent=1 // loop_footer_branch
      %19 = sbr.rel target = $region3
    $region8: #{tpu_custom_call.1} parent=1 // loop_exit
      _
    %2820 = vsyncpa [#allocation6], 1
    %s2821 = scalar_lea.sflag [#allocation6], 1
    %2822 = vsyncpa %s2821, 1
    %2823 = vsyncpa [#allocation9], 1
    %s2824 = scalar_lea.sflag [#allocation9], 1
    %2825 = vsyncpa %s2824, 1
    %2826 = vsyncpa [#allocation7], 1
    %s2827 = scalar_lea.sflag [#allocation7], 1
    %2828 = vsyncpa %s2827, 1

</llo_original>
